<compile_context>
chip_gen: v7x
topology: tpu7x:2x2x1
jax: 0.10.0
libtpu: 0.0.40
codegen_flags: <defaults>
</compile_context>

<pallas_src>
import functools

import jax
import jax.numpy as jnp
from jax import lax
from jax.experimental import pallas as pl
from jax.experimental.pallas import tpu as pltpu


def _round_up(a: int, b: int) -> int:
    return ((a + b - 1) // b) * b


def _patch_embed_kernel(p_ref, w_ref, b_ref, o_ref):
    # (tm, K) x (N, K) contracted on K -> (tm, N); f32 accumulate on the MXU.
    acc = lax.dot_general(
        p_ref[...], w_ref[...],
        dimension_numbers=(((1,), (1,)), ((), ())),
        preferred_element_type=jnp.float32,
    )
    o_ref[...] = (acc + b_ref[...]).astype(o_ref.dtype)


@functools.partial(jax.jit, static_argnames=("patch_size",))
def patch_embed(x, weight, bias, *, patch_size):
    """x: (B, C, H, W) NCHW.  weight: (d_model, C, ps, ps).  bias: (d_model,).

    Returns (B, n_patches, d_model), matching PatchEmbed.forward.
    """
    B, C, H, W = x.shape
    ps = patch_size
    Hp, Wp = H // ps, W // ps
    n_patches = Hp * Wp
    d_model = weight.shape[0]
    K = C * ps * ps
    M, N = B * n_patches, d_model

    # --- glue: NCHW -> (M, K) patch matrix, flatten order (c, kh, kw) ------
    # TODO(synk): fuse this rearrangement into the kernel's input DMA (BlockSpec
    # over the 6-D view) so the transposed copy of x is never materialized in
    # HBM; for now it is a single XLA transpose outside the kernel.
    patches = x.reshape(B, C, Hp, ps, Wp, ps)
    patches = patches.transpose(0, 2, 4, 1, 3, 5)            # (B, Hp, Wp, C, ps, ps)
    patches = patches.reshape(M, K)

    w_flat = weight.reshape(d_model, K)                      # (N, K), no transpose
    b_row = bias.reshape(1, d_model)                         # (1, N)

    # --- tile selection ------------------------------------------------------
    # Weight + bias resident (constant block index); only patch rows / output
    # stream.  Cap tm so 2*(patch tile + weight + out tile) fits ~24 MiB.
    itemsize = jnp.dtype(x.dtype).itemsize
    vmem_budget = 24 * 1024 * 1024
    tm = min(512, _round_up(M, 8))
    while tm > 128 and 2 * (tm * K + N * K + tm * N + N) * itemsize > vmem_budget:
        tm = max(128, _round_up(tm // 2, 8))

    M_pad = _round_up(M, tm)
    if M_pad != M:
        patches = jnp.pad(patches, ((0, M_pad - M), (0, 0)))

    cost = pl.CostEstimate(
        flops=2 * M_pad * N * K,
        transcendentals=0,
        bytes_accessed=(M_pad * K + N * K + N + M_pad * N) * itemsize,
    )

    out = pl.pallas_call(
        _patch_embed_kernel,
        out_shape=jax.ShapeDtypeStruct((M_pad, N), x.dtype),
        grid_spec=pltpu.PrefetchScalarGridSpec(
            num_scalar_prefetch=0,
            grid=(M_pad // tm,),
            in_specs=[
                pl.BlockSpec((tm, K), lambda i: (i, 0)),     # patches: stream rows
                pl.BlockSpec((N, K), lambda i: (0, 0)),      # weight:  resident
                pl.BlockSpec((1, N), lambda i: (0, 0)),      # bias:    resident
            ],
            out_specs=pl.BlockSpec((tm, N), lambda i: (i, 0)),
        ),
        compiler_params=pltpu.CompilerParams(
            dimension_semantics=("parallel",),
        ),
        cost_estimate=cost,
    )(patches, w_flat, b_row)

    return out[:M].reshape(B, n_patches, d_model)


def _reference(x, weight, bias, *, patch_size):
    # Plain-JAX reference: real strided convolution (NCHW / OIHW) at highest
    # precision so it matches the kernel's f32 MXU accumulation.
    y = lax.conv_general_dilated(
        x, weight,
        window_strides=(patch_size, patch_size),
        padding="VALID",
        dimension_numbers=("NCHW", "OIHW", "NCHW"),
        precision=lax.Precision.HIGHEST,
    ) + bias.reshape(1, -1, 1, 1)
    B, D, Hp, Wp = y.shape
    return y.reshape(B, D, Hp * Wp).transpose(0, 2, 1)


if __name__ == "__main__":
    # Shapes from the module spec: batch=3, in_channels=3, img_size=128,
    # patch_size=16, d_model=512  ->  n_patches=64, M=192, K=768.
    B, C, IMG, PS, D = 3, 3, 128, 16, 512

    key = jax.random.PRNGKey(0)
    kx, kw, kb = jax.random.split(key, 3)
    x = jax.random.normal(kx, (B, C, IMG, IMG), dtype=jnp.float32)
    weight = jax.random.normal(kw, (D, C, PS, PS), dtype=jnp.float32) * 0.02
    bias = jax.random.normal(kb, (D,), dtype=jnp.float32) * 0.02

    out = patch_embed(x, weight, bias, patch_size=PS)
    out = jax.block_until_ready(out)

    ref = _reference(x, weight, bias, patch_size=PS)
    assert out.shape == (B, (IMG // PS) ** 2, D), out.shape
    err = float(jnp.max(jnp.abs(out - ref)))
    assert jnp.allclose(out, ref, atol=1e-3, rtol=1e-3), err
    print("KERNEL_OK")
</pallas_src>

<mosaic_0001>
module attributes {stable_mosaic.version = 11 : i64} {
  func.func @_patch_embed_kernel(%arg0: i32, %arg1: memref<192x768xf32, #tpu.memory_space<vmem>>, %arg2: memref<512x768xf32, #tpu.memory_space<vmem>>, %arg3: memref<1x512xf32, #tpu.memory_space<vmem>>, %arg4: memref<192x512xf32, #tpu.memory_space<vmem>>) attributes {dimension_semantics = [#tpu.dimension_semantics<parallel>], iteration_bounds = array<i64: 1>, scalar_prefetch = 0 : i64, scratch_operands = 0 : i64, tpu.core_type = #tpu.core_type<tc>, window_params = [{transform_indices = @transform_0, window_bounds = array<i64: 192, 768>}, {pipeline_mode = #tpu.pipeline_mode<synchronous>, transform_indices = @transform_1, window_bounds = array<i64: 512, 768>}, {pipeline_mode = #tpu.pipeline_mode<synchronous>, transform_indices = @transform_2, window_bounds = array<i64: 1, 512>}, {transform_indices = @transform_3, window_bounds = array<i64: 192, 512>}]} {
    %c0 = arith.constant 0 : index
    %c0_0 = arith.constant 0 : index
    %0 = vector.load %arg1[%c0, %c0_0] : memref<192x768xf32, #tpu.memory_space<vmem>>, vector<192x768xf32>
    %c0_1 = arith.constant 0 : index
    %c0_2 = arith.constant 0 : index
    %1 = vector.load %arg2[%c0_1, %c0_2] : memref<512x768xf32, #tpu.memory_space<vmem>>, vector<512x768xf32>
    %cst = arith.constant dense<0.000000e+00> : vector<192x512xf32>
    %2 = tpu.matmul %0, %1, %cst {dimension_numbers = #tpu.dot_dimension_numbers<[1], [1], [0], [0], [0, 0, 1, 0], [], []>} : vector<192x768xf32>, vector<512x768xf32>, vector<192x512xf32> -> vector<192x512xf32>
    %c0_3 = arith.constant 0 : index
    %c0_4 = arith.constant 0 : index
    %3 = vector.load %arg3[%c0_3, %c0_4] : memref<1x512xf32, #tpu.memory_space<vmem>>, vector<1x512xf32>
    %4 = vector.broadcast %3 : vector<1x512xf32> to vector<192x512xf32>
    %5 = arith.addf %2, %4 : vector<192x512xf32>
    %c0_5 = arith.constant 0 : index
    %c0_6 = arith.constant 0 : index
    %6 = vector.load %arg4[%c0_5, %c0_6] : memref<192x512xf32, #tpu.memory_space<vmem>>, vector<192x512xf32>
    tpu.vector_store %arg4[%c0_5, %c0_6], %5 {strides = array<i32>} : memref<192x512xf32, #tpu.memory_space<vmem>>, vector<192x512xf32>,
    return
  }
  func.func @transform_0(%arg0: i32) -> (i32, i32) {
    %c0_i32 = arith.constant 0 : i32
    %c0_i32_0 = arith.constant 0 : i32
    return %arg0, %c0_i32 : i32, i32
  }
  func.func @transform_1(%arg0: i32) -> (i32, i32) {
    %c0_i32 = arith.constant 0 : i32
    %c0_i32_0 = arith.constant 0 : i32
    %c0_i32_1 = arith.constant 0 : i32
    return %c0_i32, %c0_i32_0 : i32, i32
  }
  func.func @transform_2(%arg0: i32) -> (i32, i32) {
    %c0_i32 = arith.constant 0 : i32
    %c0_i32_0 = arith.constant 0 : i32
    %c0_i32_1 = arith.constant 0 : i32
    return %c0_i32, %c0_i32_0 : i32, i32
  }
  func.func @transform_3(%arg0: i32) -> (i32, i32) {
    %c0_i32 = arith.constant 0 : i32
    %c0_i32_0 = arith.constant 0 : i32
    return %arg0, %c0_i32 : i32, i32
  }
}

</mosaic_0001>

<llo_original>
// kernel: patch_embed.1
$region0: #{patch_embed.1}
  #allocation0 [shape = 'u32[]', space=smem, size = 0x4, offset = 0x4, fixed_abs, tag = 'smem constant byte address 0x4 - core index']
  #allocation1 [shape = 'u32[144,128]{1,0:T(1,128)}', space=vmem, size = 0x12000, scoped, tag = 'internal scratch']
  %s0 = inlined_call_operand.vmem [shape: f32[192,768], index: 0, kind: input, shape index: {}]
  %s1 = inlined_call_operand.vmem [shape: f32[512,768], index: 1, kind: input, shape index: {}]
  %s2 = inlined_call_operand.vmem [shape: f32[1,512], index: 2, kind: input, shape index: {}]
  %s3 = inlined_call_operand.hbm [shape: f32[192,512], index: 3, kind: output, shape index: {}]
  %s4 = sld [smem:[#allocation0]]
  $region22: #{patch_embed.1} parent=0
    _
  %s6 = ssub.s32 1, %s4
  %s7 = scalar_select 0, %s6, %s4
  $region1: #{patch_embed.1} parent=0
    #allocation2 [shape = 'u8[393216]{0}', space=vmem, size = 0x60000, scoped, tag = 'output window, operand 0, single buffered']
    #allocation3 [shape = 's32[1]{0}', space=sflag, size = 0x4, scoped, tag = 'scoped memory for patch_embed.1']
    %8 = vsyncpa [#allocation3], 0
    // Predicated region
    $region2: #{patch_embed.1} parent=1 // pred_check
      _
    $region3: #{patch_embed.1} parent=1 // pred_check_branch
      %10 = sbr.rel (0) target = $region5
    $region4: #{patch_embed.1} parent=1 // pred_region
      _
    $region5: #{patch_embed.1} parent=1 // pred_fallthru
      _
    // Predicated region
    $region6: #{patch_embed.1} parent=1 // pred_check
      _
    $region7: #{patch_embed.1} parent=1 // pred_check_branch
      %12 = sbr.rel (0) target = $region9
    $region8: #{patch_embed.1} parent=1 // pred_region
      _
    $region9: #{patch_embed.1} parent=1 // pred_fallthru
      _
    // Predicated region
    $region10: #{patch_embed.1} parent=1 // pred_check
      _
    $region11: #{patch_embed.1} parent=1 // pred_check_branch
      %14 = sbr.rel (0) target = $region13
    $region12: #{patch_embed.1} parent=1 // pred_region
      _
    $region13: #{patch_embed.1} parent=1 // pred_fallthru
      _
    %v15 = vld [vmem:[%s0] sm:$0xff]
    %v16 = vld [vmem:[%s0 + $0x8] sm:$0xff]
    %v17 = vld [vmem:[%s0 + $0x10] sm:$0xff]
    %v18 = vld [vmem:[%s0 + $0x18] sm:$0xff]
    %v19 = vld [vmem:[%s0 + $0x20] sm:$0xff]
    %v20 = vld [vmem:[%s0 + $0x28] sm:$0xff]
    %v21 = vld [vmem:[%s0 + $0x30] sm:$0xff]
    %v22 = vld [vmem:[%s0 + $0x38] sm:$0xff]
    %v23 = vld [vmem:[%s0 + $0x40] sm:$0xff]
    %v24 = vld [vmem:[%s0 + $0x48] sm:$0xff]
    %v25 = vld [vmem:[%s0 + $0x50] sm:$0xff]
    %v26 = vld [vmem:[%s0 + $0x58] sm:$0xff]
    %v27 = vld [vmem:[%s0 + $0x60] sm:$0xff]
    %v28 = vld [vmem:[%s0 + $0x68] sm:$0xff]
    %v29 = vld [vmem:[%s0 + $0x70] sm:$0xff]
    %v30 = vld [vmem:[%s0 + $0x78] sm:$0xff]
    %v31 = vld [vmem:[%s0 + $0x80] sm:$0xff]
    %v32 = vld [vmem:[%s0 + $0x88] sm:$0xff]
    %v33 = vld [vmem:[%s0 + $0x90] sm:$0xff]
    %v34 = vld [vmem:[%s0 + $0x98] sm:$0xff]
    %v35 = vld [vmem:[%s0 + $0xa0] sm:$0xff]
    %v36 = vld [vmem:[%s0 + $0xa8] sm:$0xff]
    %v37 = vld [vmem:[%s0 + $0xb0] sm:$0xff]
    %v38 = vld [vmem:[%s0 + $0xb8] sm:$0xff]
    %v39 = vld [vmem:[%s0 + $0xc0] sm:$0xff]
    %v40 = vld [vmem:[%s0 + $0xc8] sm:$0xff]
    %v41 = vld [vmem:[%s0 + $0xd0] sm:$0xff]
    %v42 = vld [vmem:[%s0 + $0xd8] sm:$0xff]
    %v43 = vld [vmem:[%s0 + $0xe0] sm:$0xff]
    %v44 = vld [vmem:[%s0 + $0xe8] sm:$0xff]
    %v45 = vld [vmem:[%s0 + $0xf0] sm:$0xff]
    %v46 = vld [vmem:[%s0 + $0xf8] sm:$0xff]
    %v47 = vld [vmem:[%s0 + $0x100] sm:$0xff]
    %v48 = vld [vmem:[%s0 + $0x108] sm:$0xff]
    %v49 = vld [vmem:[%s0 + $0x110] sm:$0xff]
    %v50 = vld [vmem:[%s0 + $0x118] sm:$0xff]
    %v51 = vld [vmem:[%s0 + $0x120] sm:$0xff]
    %v52 = vld [vmem:[%s0 + $0x128] sm:$0xff]
    %v53 = vld [vmem:[%s0 + $0x130] sm:$0xff]
    %v54 = vld [vmem:[%s0 + $0x138] sm:$0xff]
    %v55 = vld [vmem:[%s0 + $0x140] sm:$0xff]
    %v56 = vld [vmem:[%s0 + $0x148] sm:$0xff]
    %v57 = vld [vmem:[%s0 + $0x150] sm:$0xff]
    %v58 = vld [vmem:[%s0 + $0x158] sm:$0xff]
    %v59 = vld [vmem:[%s0 + $0x160] sm:$0xff]
    %v60 = vld [vmem:[%s0 + $0x168] sm:$0xff]
    %v61 = vld [vmem:[%s0 + $0x170] sm:$0xff]
    %v62 = vld [vmem:[%s0 + $0x178] sm:$0xff]
    %v63 = vld [vmem:[%s0 + $0x180] sm:$0xff]
    %v64 = vld [vmem:[%s0 + $0x188] sm:$0xff]
    %v65 = vld [vmem:[%s0 + $0x190] sm:$0xff]
    %v66 = vld [vmem:[%s0 + $0x198] sm:$0xff]
    %v67 = vld [vmem:[%s0 + $0x1a0] sm:$0xff]
    %v68 = vld [vmem:[%s0 + $0x1a8] sm:$0xff]
    %v69 = vld [vmem:[%s0 + $0x1b0] sm:$0xff]
    %v70 = vld [vmem:[%s0 + $0x1b8] sm:$0xff]
    %v71 = vld [vmem:[%s0 + $0x1c0] sm:$0xff]
    %v72 = vld [vmem:[%s0 + $0x1c8] sm:$0xff]
    %v73 = vld [vmem:[%s0 + $0x1d0] sm:$0xff]
    %v74 = vld [vmem:[%s0 + $0x1d8] sm:$0xff]
    %v75 = vld [vmem:[%s0 + $0x1e0] sm:$0xff]
    %v76 = vld [vmem:[%s0 + $0x1e8] sm:$0xff]
    %v77 = vld [vmem:[%s0 + $0x1f0] sm:$0xff]
    %v78 = vld [vmem:[%s0 + $0x1f8] sm:$0xff]
    %v79 = vld [vmem:[%s0 + $0x200] sm:$0xff]
    %v80 = vld [vmem:[%s0 + $0x208] sm:$0xff]
    %v81 = vld [vmem:[%s0 + $0x210] sm:$0xff]
    %v82 = vld [vmem:[%s0 + $0x218] sm:$0xff]
    %v83 = vld [vmem:[%s0 + $0x220] sm:$0xff]
    %v84 = vld [vmem:[%s0 + $0x228] sm:$0xff]
    %v85 = vld [vmem:[%s0 + $0x230] sm:$0xff]
    %v86 = vld [vmem:[%s0 + $0x238] sm:$0xff]
    %v87 = vld [vmem:[%s0 + $0x240] sm:$0xff]
    %v88 = vld [vmem:[%s0 + $0x248] sm:$0xff]
    %v89 = vld [vmem:[%s0 + $0x250] sm:$0xff]
    %v90 = vld [vmem:[%s0 + $0x258] sm:$0xff]
    %v91 = vld [vmem:[%s0 + $0x260] sm:$0xff]
    %v92 = vld [vmem:[%s0 + $0x268] sm:$0xff]
    %v93 = vld [vmem:[%s0 + $0x270] sm:$0xff]
    %v94 = vld [vmem:[%s0 + $0x278] sm:$0xff]
    %v95 = vld [vmem:[%s0 + $0x280] sm:$0xff]
    %v96 = vld [vmem:[%s0 + $0x288] sm:$0xff]
    %v97 = vld [vmem:[%s0 + $0x290] sm:$0xff]
    %v98 = vld [vmem:[%s0 + $0x298] sm:$0xff]
    %v99 = vld [vmem:[%s0 + $0x2a0] sm:$0xff]
    %v100 = vld [vmem:[%s0 + $0x2a8] sm:$0xff]
    %v101 = vld [vmem:[%s0 + $0x2b0] sm:$0xff]
    %v102 = vld [vmem:[%s0 + $0x2b8] sm:$0xff]
    %v103 = vld [vmem:[%s0 + $0x2c0] sm:$0xff]
    %v104 = vld [vmem:[%s0 + $0x2c8] sm:$0xff]
    %v105 = vld [vmem:[%s0 + $0x2d0] sm:$0xff]
    %v106 = vld [vmem:[%s0 + $0x2d8] sm:$0xff]
    %v107 = vld [vmem:[%s0 + $0x2e0] sm:$0xff]
    %v108 = vld [vmem:[%s0 + $0x2e8] sm:$0xff]
    %v109 = vld [vmem:[%s0 + $0x2f0] sm:$0xff]
    %v110 = vld [vmem:[%s0 + $0x2f8] sm:$0xff]
    %v111 = vld [vmem:[%s0 + $0x300] sm:$0xff]
    %v112 = vld [vmem:[%s0 + $0x308] sm:$0xff]
    %v113 = vld [vmem:[%s0 + $0x310] sm:$0xff]
    %v114 = vld [vmem:[%s0 + $0x318] sm:$0xff]
    %v115 = vld [vmem:[%s0 + $0x320] sm:$0xff]
    %v116 = vld [vmem:[%s0 + $0x328] sm:$0xff]
    %v117 = vld [vmem:[%s0 + $0x330] sm:$0xff]
    %v118 = vld [vmem:[%s0 + $0x338] sm:$0xff]
    %v119 = vld [vmem:[%s0 + $0x340] sm:$0xff]
    %v120 = vld [vmem:[%s0 + $0x348] sm:$0xff]
    %v121 = vld [vmem:[%s0 + $0x350] sm:$0xff]
    %v122 = vld [vmem:[%s0 + $0x358] sm:$0xff]
    %v123 = vld [vmem:[%s0 + $0x360] sm:$0xff]
    %v124 = vld [vmem:[%s0 + $0x368] sm:$0xff]
    %v125 = vld [vmem:[%s0 + $0x370] sm:$0xff]
    %v126 = vld [vmem:[%s0 + $0x378] sm:$0xff]
    %v127 = vld [vmem:[%s0 + $0x380] sm:$0xff]
    %v128 = vld [vmem:[%s0 + $0x388] sm:$0xff]
    %v129 = vld [vmem:[%s0 + $0x390] sm:$0xff]
    %v130 = vld [vmem:[%s0 + $0x398] sm:$0xff]
    %v131 = vld [vmem:[%s0 + $0x3a0] sm:$0xff]
    %v132 = vld [vmem:[%s0 + $0x3a8] sm:$0xff]
    %v133 = vld [vmem:[%s0 + $0x3b0] sm:$0xff]
    %v134 = vld [vmem:[%s0 + $0x3b8] sm:$0xff]
    %v135 = vld [vmem:[%s0 + $0x3c0] sm:$0xff]
    %v136 = vld [vmem:[%s0 + $0x3c8] sm:$0xff]
    %v137 = vld [vmem:[%s0 + $0x3d0] sm:$0xff]
    %v138 = vld [vmem:[%s0 + $0x3d8] sm:$0xff]
    %v139 = vld [vmem:[%s0 + $0x3e0] sm:$0xff]
    %v140 = vld [vmem:[%s0 + $0x3e8] sm:$0xff]
    %v141 = vld [vmem:[%s0 + $0x3f0] sm:$0xff]
    %v142 = vld [vmem:[%s0 + $0x3f8] sm:$0xff]
    %v143 = vld [vmem:[%s0 + $0x400] sm:$0xff]
    %v144 = vld [vmem:[%s0 + $0x408] sm:$0xff]
    %v145 = vld [vmem:[%s0 + $0x410] sm:$0xff]
    %v146 = vld [vmem:[%s0 + $0x418] sm:$0xff]
    %v147 = vld [vmem:[%s0 + $0x420] sm:$0xff]
    %v148 = vld [vmem:[%s0 + $0x428] sm:$0xff]
    %v149 = vld [vmem:[%s0 + $0x430] sm:$0xff]
    %v150 = vld [vmem:[%s0 + $0x438] sm:$0xff]
    %v151 = vld [vmem:[%s0 + $0x440] sm:$0xff]
    %v152 = vld [vmem:[%s0 + $0x448] sm:$0xff]
    %v153 = vld [vmem:[%s0 + $0x450] sm:$0xff]
    %v154 = vld [vmem:[%s0 + $0x458] sm:$0xff]
    %v155 = vld [vmem:[%s0 + $0x460] sm:$0xff]
    %v156 = vld [vmem:[%s0 + $0x468] sm:$0xff]
    %v157 = vld [vmem:[%s0 + $0x470] sm:$0xff]
    %v158 = vld [vmem:[%s0 + $0x478] sm:$0xff]
    %v159 = vld [vmem:[%s1] sm:$0xff]
    %v160 = vld [vmem:[%s1 + $0x8] sm:$0xff]
    %v161 = vld [vmem:[%s1 + $0x10] sm:$0xff]
    %v162 = vld [vmem:[%s1 + $0x18] sm:$0xff]
    %v163 = vld [vmem:[%s1 + $0x20] sm:$0xff]
    %v164 = vld [vmem:[%s1 + $0x28] sm:$0xff]
    %v165 = vld [vmem:[%s1 + $0x30] sm:$0xff]
    %v166 = vld [vmem:[%s1 + $0x38] sm:$0xff]
    %v167 = vld [vmem:[%s1 + $0x40] sm:$0xff]
    %v168 = vld [vmem:[%s1 + $0x48] sm:$0xff]
    %v169 = vld [vmem:[%s1 + $0x50] sm:$0xff]
    %v170 = vld [vmem:[%s1 + $0x58] sm:$0xff]
    %v171 = vld [vmem:[%s1 + $0x60] sm:$0xff]
    %v172 = vld [vmem:[%s1 + $0x68] sm:$0xff]
    %v173 = vld [vmem:[%s1 + $0x70] sm:$0xff]
    %v174 = vld [vmem:[%s1 + $0x78] sm:$0xff]
    %v175 = vld [vmem:[%s1 + $0x80] sm:$0xff]
    %v176 = vld [vmem:[%s1 + $0x88] sm:$0xff]
    %v177 = vld [vmem:[%s1 + $0x90] sm:$0xff]
    %v178 = vld [vmem:[%s1 + $0x98] sm:$0xff]
    %v179 = vld [vmem:[%s1 + $0xa0] sm:$0xff]
    %v180 = vld [vmem:[%s1 + $0xa8] sm:$0xff]
    %v181 = vld [vmem:[%s1 + $0xb0] sm:$0xff]
    %v182 = vld [vmem:[%s1 + $0xb8] sm:$0xff]
    %v183 = vld [vmem:[%s1 + $0xc0] sm:$0xff]
    %v184 = vld [vmem:[%s1 + $0xc8] sm:$0xff]
    %v185 = vld [vmem:[%s1 + $0xd0] sm:$0xff]
    %v186 = vld [vmem:[%s1 + $0xd8] sm:$0xff]
    %v187 = vld [vmem:[%s1 + $0xe0] sm:$0xff]
    %v188 = vld [vmem:[%s1 + $0xe8] sm:$0xff]
    %v189 = vld [vmem:[%s1 + $0xf0] sm:$0xff]
    %v190 = vld [vmem:[%s1 + $0xf8] sm:$0xff]
    %v191 = vld [vmem:[%s1 + $0x100] sm:$0xff]
    %v192 = vld [vmem:[%s1 + $0x108] sm:$0xff]
    %v193 = vld [vmem:[%s1 + $0x110] sm:$0xff]
    %v194 = vld [vmem:[%s1 + $0x118] sm:$0xff]
    %v195 = vld [vmem:[%s1 + $0x120] sm:$0xff]
    %v196 = vld [vmem:[%s1 + $0x128] sm:$0xff]
    %v197 = vld [vmem:[%s1 + $0x130] sm:$0xff]
    %v198 = vld [vmem:[%s1 + $0x138] sm:$0xff]
    %v199 = vld [vmem:[%s1 + $0x140] sm:$0xff]
    %v200 = vld [vmem:[%s1 + $0x148] sm:$0xff]
    %v201 = vld [vmem:[%s1 + $0x150] sm:$0xff]
    %v202 = vld [vmem:[%s1 + $0x158] sm:$0xff]
    %v203 = vld [vmem:[%s1 + $0x160] sm:$0xff]
    %v204 = vld [vmem:[%s1 + $0x168] sm:$0xff]
    %v205 = vld [vmem:[%s1 + $0x170] sm:$0xff]
    %v206 = vld [vmem:[%s1 + $0x178] sm:$0xff]
    %v207 = vld [vmem:[%s1 + $0x180] sm:$0xff]
    %v208 = vld [vmem:[%s1 + $0x188] sm:$0xff]
    %v209 = vld [vmem:[%s1 + $0x190] sm:$0xff]
    %v210 = vld [vmem:[%s1 + $0x198] sm:$0xff]
    %v211 = vld [vmem:[%s1 + $0x1a0] sm:$0xff]
    %v212 = vld [vmem:[%s1 + $0x1a8] sm:$0xff]
    %v213 = vld [vmem:[%s1 + $0x1b0] sm:$0xff]
    %v214 = vld [vmem:[%s1 + $0x1b8] sm:$0xff]
    %v215 = vld [vmem:[%s1 + $0x1c0] sm:$0xff]
    %v216 = vld [vmem:[%s1 + $0x1c8] sm:$0xff]
    %v217 = vld [vmem:[%s1 + $0x1d0] sm:$0xff]
    %v218 = vld [vmem:[%s1 + $0x1d8] sm:$0xff]
    %v219 = vld [vmem:[%s1 + $0x1e0] sm:$0xff]
    %v220 = vld [vmem:[%s1 + $0x1e8] sm:$0xff]
    %v221 = vld [vmem:[%s1 + $0x1f0] sm:$0xff]
    %v222 = vld [vmem:[%s1 + $0x1f8] sm:$0xff]
    %v223 = vld [vmem:[%s1 + $0x200] sm:$0xff]
    %v224 = vld [vmem:[%s1 + $0x208] sm:$0xff]
    %v225 = vld [vmem:[%s1 + $0x210] sm:$0xff]
    %v226 = vld [vmem:[%s1 + $0x218] sm:$0xff]
    %v227 = vld [vmem:[%s1 + $0x220] sm:$0xff]
    %v228 = vld [vmem:[%s1 + $0x228] sm:$0xff]
    %v229 = vld [vmem:[%s1 + $0x230] sm:$0xff]
    %v230 = vld [vmem:[%s1 + $0x238] sm:$0xff]
    %v231 = vld [vmem:[%s1 + $0x240] sm:$0xff]
    %v232 = vld [vmem:[%s1 + $0x248] sm:$0xff]
    %v233 = vld [vmem:[%s1 + $0x250] sm:$0xff]
    %v234 = vld [vmem:[%s1 + $0x258] sm:$0xff]
    %v235 = vld [vmem:[%s1 + $0x260] sm:$0xff]
    %v236 = vld [vmem:[%s1 + $0x268] sm:$0xff]
    %v237 = vld [vmem:[%s1 + $0x270] sm:$0xff]
    %v238 = vld [vmem:[%s1 + $0x278] sm:$0xff]
    %v239 = vld [vmem:[%s1 + $0x280] sm:$0xff]
    %v240 = vld [vmem:[%s1 + $0x288] sm:$0xff]
    %v241 = vld [vmem:[%s1 + $0x290] sm:$0xff]
    %v242 = vld [vmem:[%s1 + $0x298] sm:$0xff]
    %v243 = vld [vmem:[%s1 + $0x2a0] sm:$0xff]
    %v244 = vld [vmem:[%s1 + $0x2a8] sm:$0xff]
    %v245 = vld [vmem:[%s1 + $0x2b0] sm:$0xff]
    %v246 = vld [vmem:[%s1 + $0x2b8] sm:$0xff]
    %v247 = vld [vmem:[%s1 + $0x2c0] sm:$0xff]
    %v248 = vld [vmem:[%s1 + $0x2c8] sm:$0xff]
    %v249 = vld [vmem:[%s1 + $0x2d0] sm:$0xff]
    %v250 = vld [vmem:[%s1 + $0x2d8] sm:$0xff]
    %v251 = vld [vmem:[%s1 + $0x2e0] sm:$0xff]
    %v252 = vld [vmem:[%s1 + $0x2e8] sm:$0xff]
    %v253 = vld [vmem:[%s1 + $0x2f0] sm:$0xff]
    %v254 = vld [vmem:[%s1 + $0x2f8] sm:$0xff]
    %v255 = vld [vmem:[%s1 + $0x300] sm:$0xff]
    %v256 = vld [vmem:[%s1 + $0x308] sm:$0xff]
    %v257 = vld [vmem:[%s1 + $0x310] sm:$0xff]
    %v258 = vld [vmem:[%s1 + $0x318] sm:$0xff]
    %v259 = vld [vmem:[%s1 + $0x320] sm:$0xff]
    %v260 = vld [vmem:[%s1 + $0x328] sm:$0xff]
    %v261 = vld [vmem:[%s1 + $0x330] sm:$0xff]
    %v262 = vld [vmem:[%s1 + $0x338] sm:$0xff]
    %v263 = vld [vmem:[%s1 + $0x340] sm:$0xff]
    %v264 = vld [vmem:[%s1 + $0x348] sm:$0xff]
    %v265 = vld [vmem:[%s1 + $0x350] sm:$0xff]
    %v266 = vld [vmem:[%s1 + $0x358] sm:$0xff]
    %v267 = vld [vmem:[%s1 + $0x360] sm:$0xff]
    %v268 = vld [vmem:[%s1 + $0x368] sm:$0xff]
    %v269 = vld [vmem:[%s1 + $0x370] sm:$0xff]
    %v270 = vld [vmem:[%s1 + $0x378] sm:$0xff]
    %v271 = vld [vmem:[%s1 + $0x380] sm:$0xff]
    %v272 = vld [vmem:[%s1 + $0x388] sm:$0xff]
    %v273 = vld [vmem:[%s1 + $0x390] sm:$0xff]
    %v274 = vld [vmem:[%s1 + $0x398] sm:$0xff]
    %v275 = vld [vmem:[%s1 + $0x3a0] sm:$0xff]
    %v276 = vld [vmem:[%s1 + $0x3a8] sm:$0xff]
    %v277 = vld [vmem:[%s1 + $0x3b0] sm:$0xff]
    %v278 = vld [vmem:[%s1 + $0x3b8] sm:$0xff]
    %v279 = vld [vmem:[%s1 + $0x3c0] sm:$0xff]
    %v280 = vld [vmem:[%s1 + $0x3c8] sm:$0xff]
    %v281 = vld [vmem:[%s1 + $0x3d0] sm:$0xff]
    %v282 = vld [vmem:[%s1 + $0x3d8] sm:$0xff]
    %v283 = vld [vmem:[%s1 + $0x3e0] sm:$0xff]
    %v284 = vld [vmem:[%s1 + $0x3e8] sm:$0xff]
    %v285 = vld [vmem:[%s1 + $0x3f0] sm:$0xff]
    %v286 = vld [vmem:[%s1 + $0x3f8] sm:$0xff]
    %v287 = vld [vmem:[%s1 + $0x400] sm:$0xff]
    %v288 = vld [vmem:[%s1 + $0x408] sm:$0xff]
    %v289 = vld [vmem:[%s1 + $0x410] sm:$0xff]
    %v290 = vld [vmem:[%s1 + $0x418] sm:$0xff]
    %v291 = vld [vmem:[%s1 + $0x420] sm:$0xff]
    %v292 = vld [vmem:[%s1 + $0x428] sm:$0xff]
    %v293 = vld [vmem:[%s1 + $0x430] sm:$0xff]
    %v294 = vld [vmem:[%s1 + $0x438] sm:$0xff]
    %v295 = vld [vmem:[%s1 + $0x440] sm:$0xff]
    %v296 = vld [vmem:[%s1 + $0x448] sm:$0xff]
    %v297 = vld [vmem:[%s1 + $0x450] sm:$0xff]
    %v298 = vld [vmem:[%s1 + $0x458] sm:$0xff]
    %v299 = vld [vmem:[%s1 + $0x460] sm:$0xff]
    %v300 = vld [vmem:[%s1 + $0x468] sm:$0xff]
    %v301 = vld [vmem:[%s1 + $0x470] sm:$0xff]
    %v302 = vld [vmem:[%s1 + $0x478] sm:$0xff]
    %v303 = vld [vmem:[%s1 + $0x480] sm:$0xff]
    %v304 = vld [vmem:[%s1 + $0x488] sm:$0xff]
    %v305 = vld [vmem:[%s1 + $0x490] sm:$0xff]
    %v306 = vld [vmem:[%s1 + $0x498] sm:$0xff]
    %v307 = vld [vmem:[%s1 + $0x4a0] sm:$0xff]
    %v308 = vld [vmem:[%s1 + $0x4a8] sm:$0xff]
    %v309 = vld [vmem:[%s1 + $0x4b0] sm:$0xff]
    %v310 = vld [vmem:[%s1 + $0x4b8] sm:$0xff]
    %v311 = vld [vmem:[%s1 + $0x4c0] sm:$0xff]
    %v312 = vld [vmem:[%s1 + $0x4c8] sm:$0xff]
    %v313 = vld [vmem:[%s1 + $0x4d0] sm:$0xff]
    %v314 = vld [vmem:[%s1 + $0x4d8] sm:$0xff]
    %v315 = vld [vmem:[%s1 + $0x4e0] sm:$0xff]
    %v316 = vld [vmem:[%s1 + $0x4e8] sm:$0xff]
    %v317 = vld [vmem:[%s1 + $0x4f0] sm:$0xff]
    %v318 = vld [vmem:[%s1 + $0x4f8] sm:$0xff]
    %v319 = vld [vmem:[%s1 + $0x500] sm:$0xff]
    %v320 = vld [vmem:[%s1 + $0x508] sm:$0xff]
    %v321 = vld [vmem:[%s1 + $0x510] sm:$0xff]
    %v322 = vld [vmem:[%s1 + $0x518] sm:$0xff]
    %v323 = vld [vmem:[%s1 + $0x520] sm:$0xff]
    %v324 = vld [vmem:[%s1 + $0x528] sm:$0xff]
    %v325 = vld [vmem:[%s1 + $0x530] sm:$0xff]
    %v326 = vld [vmem:[%s1 + $0x538] sm:$0xff]
    %v327 = vld [vmem:[%s1 + $0x540] sm:$0xff]
    %v328 = vld [vmem:[%s1 + $0x548] sm:$0xff]
    %v329 = vld [vmem:[%s1 + $0x550] sm:$0xff]
    %v330 = vld [vmem:[%s1 + $0x558] sm:$0xff]
    %v331 = vld [vmem:[%s1 + $0x560] sm:$0xff]
    %v332 = vld [vmem:[%s1 + $0x568] sm:$0xff]
    %v333 = vld [vmem:[%s1 + $0x570] sm:$0xff]
    %v334 = vld [vmem:[%s1 + $0x578] sm:$0xff]
    %v335 = vld [vmem:[%s1 + $0x580] sm:$0xff]
    %v336 = vld [vmem:[%s1 + $0x588] sm:$0xff]
    %v337 = vld [vmem:[%s1 + $0x590] sm:$0xff]
    %v338 = vld [vmem:[%s1 + $0x598] sm:$0xff]
    %v339 = vld [vmem:[%s1 + $0x5a0] sm:$0xff]
    %v340 = vld [vmem:[%s1 + $0x5a8] sm:$0xff]
    %v341 = vld [vmem:[%s1 + $0x5b0] sm:$0xff]
    %v342 = vld [vmem:[%s1 + $0x5b8] sm:$0xff]
    %v343 = vld [vmem:[%s1 + $0x5c0] sm:$0xff]
    %v344 = vld [vmem:[%s1 + $0x5c8] sm:$0xff]
    %v345 = vld [vmem:[%s1 + $0x5d0] sm:$0xff]
    %v346 = vld [vmem:[%s1 + $0x5d8] sm:$0xff]
    %v347 = vld [vmem:[%s1 + $0x5e0] sm:$0xff]
    %v348 = vld [vmem:[%s1 + $0x5e8] sm:$0xff]
    %v349 = vld [vmem:[%s1 + $0x5f0] sm:$0xff]
    %v350 = vld [vmem:[%s1 + $0x5f8] sm:$0xff]
    %v351 = vld [vmem:[%s1 + $0x600] sm:$0xff]
    %v352 = vld [vmem:[%s1 + $0x608] sm:$0xff]
    %v353 = vld [vmem:[%s1 + $0x610] sm:$0xff]
    %v354 = vld [vmem:[%s1 + $0x618] sm:$0xff]
    %v355 = vld [vmem:[%s1 + $0x620] sm:$0xff]
    %v356 = vld [vmem:[%s1 + $0x628] sm:$0xff]
    %v357 = vld [vmem:[%s1 + $0x630] sm:$0xff]
    %v358 = vld [vmem:[%s1 + $0x638] sm:$0xff]
    %v359 = vld [vmem:[%s1 + $0x640] sm:$0xff]
    %v360 = vld [vmem:[%s1 + $0x648] sm:$0xff]
    %v361 = vld [vmem:[%s1 + $0x650] sm:$0xff]
    %v362 = vld [vmem:[%s1 + $0x658] sm:$0xff]
    %v363 = vld [vmem:[%s1 + $0x660] sm:$0xff]
    %v364 = vld [vmem:[%s1 + $0x668] sm:$0xff]
    %v365 = vld [vmem:[%s1 + $0x670] sm:$0xff]
    %v366 = vld [vmem:[%s1 + $0x678] sm:$0xff]
    %v367 = vld [vmem:[%s1 + $0x680] sm:$0xff]
    %v368 = vld [vmem:[%s1 + $0x688] sm:$0xff]
    %v369 = vld [vmem:[%s1 + $0x690] sm:$0xff]
    %v370 = vld [vmem:[%s1 + $0x698] sm:$0xff]
    %v371 = vld [vmem:[%s1 + $0x6a0] sm:$0xff]
    %v372 = vld [vmem:[%s1 + $0x6a8] sm:$0xff]
    %v373 = vld [vmem:[%s1 + $0x6b0] sm:$0xff]
    %v374 = vld [vmem:[%s1 + $0x6b8] sm:$0xff]
    %v375 = vld [vmem:[%s1 + $0x6c0] sm:$0xff]
    %v376 = vld [vmem:[%s1 + $0x6c8] sm:$0xff]
    %v377 = vld [vmem:[%s1 + $0x6d0] sm:$0xff]
    %v378 = vld [vmem:[%s1 + $0x6d8] sm:$0xff]
    %v379 = vld [vmem:[%s1 + $0x6e0] sm:$0xff]
    %v380 = vld [vmem:[%s1 + $0x6e8] sm:$0xff]
    %v381 = vld [vmem:[%s1 + $0x6f0] sm:$0xff]
    %v382 = vld [vmem:[%s1 + $0x6f8] sm:$0xff]
    %v383 = vld [vmem:[%s1 + $0x700] sm:$0xff]
    %v384 = vld [vmem:[%s1 + $0x708] sm:$0xff]
    %v385 = vld [vmem:[%s1 + $0x710] sm:$0xff]
    %v386 = vld [vmem:[%s1 + $0x718] sm:$0xff]
    %v387 = vld [vmem:[%s1 + $0x720] sm:$0xff]
    %v388 = vld [vmem:[%s1 + $0x728] sm:$0xff]
    %v389 = vld [vmem:[%s1 + $0x730] sm:$0xff]
    %v390 = vld [vmem:[%s1 + $0x738] sm:$0xff]
    %v391 = vld [vmem:[%s1 + $0x740] sm:$0xff]
    %v392 = vld [vmem:[%s1 + $0x748] sm:$0xff]
    %v393 = vld [vmem:[%s1 + $0x750] sm:$0xff]
    %v394 = vld [vmem:[%s1 + $0x758] sm:$0xff]
    %v395 = vld [vmem:[%s1 + $0x760] sm:$0xff]
    %v396 = vld [vmem:[%s1 + $0x768] sm:$0xff]
    %v397 = vld [vmem:[%s1 + $0x770] sm:$0xff]
    %v398 = vld [vmem:[%s1 + $0x778] sm:$0xff]
    %v399 = vld [vmem:[%s1 + $0x780] sm:$0xff]
    %v400 = vld [vmem:[%s1 + $0x788] sm:$0xff]
    %v401 = vld [vmem:[%s1 + $0x790] sm:$0xff]
    %v402 = vld [vmem:[%s1 + $0x798] sm:$0xff]
    %v403 = vld [vmem:[%s1 + $0x7a0] sm:$0xff]
    %v404 = vld [vmem:[%s1 + $0x7a8] sm:$0xff]
    %v405 = vld [vmem:[%s1 + $0x7b0] sm:$0xff]
    %v406 = vld [vmem:[%s1 + $0x7b8] sm:$0xff]
    %v407 = vld [vmem:[%s1 + $0x7c0] sm:$0xff]
    %v408 = vld [vmem:[%s1 + $0x7c8] sm:$0xff]
    %v409 = vld [vmem:[%s1 + $0x7d0] sm:$0xff]
    %v410 = vld [vmem:[%s1 + $0x7d8] sm:$0xff]
    %v411 = vld [vmem:[%s1 + $0x7e0] sm:$0xff]
    %v412 = vld [vmem:[%s1 + $0x7e8] sm:$0xff]
    %v413 = vld [vmem:[%s1 + $0x7f0] sm:$0xff]
    %v414 = vld [vmem:[%s1 + $0x7f8] sm:$0xff]
    %v415 = vld [vmem:[%s1 + $0x800] sm:$0xff]
    %v416 = vld [vmem:[%s1 + $0x808] sm:$0xff]
    %v417 = vld [vmem:[%s1 + $0x810] sm:$0xff]
    %v418 = vld [vmem:[%s1 + $0x818] sm:$0xff]
    %v419 = vld [vmem:[%s1 + $0x820] sm:$0xff]
    %v420 = vld [vmem:[%s1 + $0x828] sm:$0xff]
    %v421 = vld [vmem:[%s1 + $0x830] sm:$0xff]
    %v422 = vld [vmem:[%s1 + $0x838] sm:$0xff]
    %v423 = vld [vmem:[%s1 + $0x840] sm:$0xff]
    %v424 = vld [vmem:[%s1 + $0x848] sm:$0xff]
    %v425 = vld [vmem:[%s1 + $0x850] sm:$0xff]
    %v426 = vld [vmem:[%s1 + $0x858] sm:$0xff]
    %v427 = vld [vmem:[%s1 + $0x860] sm:$0xff]
    %v428 = vld [vmem:[%s1 + $0x868] sm:$0xff]
    %v429 = vld [vmem:[%s1 + $0x870] sm:$0xff]
    %v430 = vld [vmem:[%s1 + $0x878] sm:$0xff]
    %v431 = vld [vmem:[%s1 + $0x880] sm:$0xff]
    %v432 = vld [vmem:[%s1 + $0x888] sm:$0xff]
    %v433 = vld [vmem:[%s1 + $0x890] sm:$0xff]
    %v434 = vld [vmem:[%s1 + $0x898] sm:$0xff]
    %v435 = vld [vmem:[%s1 + $0x8a0] sm:$0xff]
    %v436 = vld [vmem:[%s1 + $0x8a8] sm:$0xff]
    %v437 = vld [vmem:[%s1 + $0x8b0] sm:$0xff]
    %v438 = vld [vmem:[%s1 + $0x8b8] sm:$0xff]
    %v439 = vld [vmem:[%s1 + $0x8c0] sm:$0xff]
    %v440 = vld [vmem:[%s1 + $0x8c8] sm:$0xff]
    %v441 = vld [vmem:[%s1 + $0x8d0] sm:$0xff]
    %v442 = vld [vmem:[%s1 + $0x8d8] sm:$0xff]
    %v443 = vld [vmem:[%s1 + $0x8e0] sm:$0xff]
    %v444 = vld [vmem:[%s1 + $0x8e8] sm:$0xff]
    %v445 = vld [vmem:[%s1 + $0x8f0] sm:$0xff]
    %v446 = vld [vmem:[%s1 + $0x8f8] sm:$0xff]
    %v447 = vld [vmem:[%s1 + $0x900] sm:$0xff]
    %v448 = vld [vmem:[%s1 + $0x908] sm:$0xff]
    %v449 = vld [vmem:[%s1 + $0x910] sm:$0xff]
    %v450 = vld [vmem:[%s1 + $0x918] sm:$0xff]
    %v451 = vld [vmem:[%s1 + $0x920] sm:$0xff]
    %v452 = vld [vmem:[%s1 + $0x928] sm:$0xff]
    %v453 = vld [vmem:[%s1 + $0x930] sm:$0xff]
    %v454 = vld [vmem:[%s1 + $0x938] sm:$0xff]
    %v455 = vld [vmem:[%s1 + $0x940] sm:$0xff]
    %v456 = vld [vmem:[%s1 + $0x948] sm:$0xff]
    %v457 = vld [vmem:[%s1 + $0x950] sm:$0xff]
    %v458 = vld [vmem:[%s1 + $0x958] sm:$0xff]
    %v459 = vld [vmem:[%s1 + $0x960] sm:$0xff]
    %v460 = vld [vmem:[%s1 + $0x968] sm:$0xff]
    %v461 = vld [vmem:[%s1 + $0x970] sm:$0xff]
    %v462 = vld [vmem:[%s1 + $0x978] sm:$0xff]
    %v463 = vld [vmem:[%s1 + $0x980] sm:$0xff]
    %v464 = vld [vmem:[%s1 + $0x988] sm:$0xff]
    %v465 = vld [vmem:[%s1 + $0x990] sm:$0xff]
    %v466 = vld [vmem:[%s1 + $0x998] sm:$0xff]
    %v467 = vld [vmem:[%s1 + $0x9a0] sm:$0xff]
    %v468 = vld [vmem:[%s1 + $0x9a8] sm:$0xff]
    %v469 = vld [vmem:[%s1 + $0x9b0] sm:$0xff]
    %v470 = vld [vmem:[%s1 + $0x9b8] sm:$0xff]
    %v471 = vld [vmem:[%s1 + $0x9c0] sm:$0xff]
    %v472 = vld [vmem:[%s1 + $0x9c8] sm:$0xff]
    %v473 = vld [vmem:[%s1 + $0x9d0] sm:$0xff]
    %v474 = vld [vmem:[%s1 + $0x9d8] sm:$0xff]
    %v475 = vld [vmem:[%s1 + $0x9e0] sm:$0xff]
    %v476 = vld [vmem:[%s1 + $0x9e8] sm:$0xff]
    %v477 = vld [vmem:[%s1 + $0x9f0] sm:$0xff]
    %v478 = vld [vmem:[%s1 + $0x9f8] sm:$0xff]
    %v479 = vld [vmem:[%s1 + $0xa00] sm:$0xff]
    %v480 = vld [vmem:[%s1 + $0xa08] sm:$0xff]
    %v481 = vld [vmem:[%s1 + $0xa10] sm:$0xff]
    %v482 = vld [vmem:[%s1 + $0xa18] sm:$0xff]
    %v483 = vld [vmem:[%s1 + $0xa20] sm:$0xff]
    %v484 = vld [vmem:[%s1 + $0xa28] sm:$0xff]
    %v485 = vld [vmem:[%s1 + $0xa30] sm:$0xff]
    %v486 = vld [vmem:[%s1 + $0xa38] sm:$0xff]
    %v487 = vld [vmem:[%s1 + $0xa40] sm:$0xff]
    %v488 = vld [vmem:[%s1 + $0xa48] sm:$0xff]
    %v489 = vld [vmem:[%s1 + $0xa50] sm:$0xff]
    %v490 = vld [vmem:[%s1 + $0xa58] sm:$0xff]
    %v491 = vld [vmem:[%s1 + $0xa60] sm:$0xff]
    %v492 = vld [vmem:[%s1 + $0xa68] sm:$0xff]
    %v493 = vld [vmem:[%s1 + $0xa70] sm:$0xff]
    %v494 = vld [vmem:[%s1 + $0xa78] sm:$0xff]
    %v495 = vld [vmem:[%s1 + $0xa80] sm:$0xff]
    %v496 = vld [vmem:[%s1 + $0xa88] sm:$0xff]
    %v497 = vld [vmem:[%s1 + $0xa90] sm:$0xff]
    %v498 = vld [vmem:[%s1 + $0xa98] sm:$0xff]
    %v499 = vld [vmem:[%s1 + $0xaa0] sm:$0xff]
    %v500 = vld [vmem:[%s1 + $0xaa8] sm:$0xff]
    %v501 = vld [vmem:[%s1 + $0xab0] sm:$0xff]
    %v502 = vld [vmem:[%s1 + $0xab8] sm:$0xff]
    %v503 = vld [vmem:[%s1 + $0xac0] sm:$0xff]
    %v504 = vld [vmem:[%s1 + $0xac8] sm:$0xff]
    %v505 = vld [vmem:[%s1 + $0xad0] sm:$0xff]
    %v506 = vld [vmem:[%s1 + $0xad8] sm:$0xff]
    %v507 = vld [vmem:[%s1 + $0xae0] sm:$0xff]
    %v508 = vld [vmem:[%s1 + $0xae8] sm:$0xff]
    %v509 = vld [vmem:[%s1 + $0xaf0] sm:$0xff]
    %v510 = vld [vmem:[%s1 + $0xaf8] sm:$0xff]
    %v511 = vld [vmem:[%s1 + $0xb00] sm:$0xff]
    %v512 = vld [vmem:[%s1 + $0xb08] sm:$0xff]
    %v513 = vld [vmem:[%s1 + $0xb10] sm:$0xff]
    %v514 = vld [vmem:[%s1 + $0xb18] sm:$0xff]
    %v515 = vld [vmem:[%s1 + $0xb20] sm:$0xff]
    %v516 = vld [vmem:[%s1 + $0xb28] sm:$0xff]
    %v517 = vld [vmem:[%s1 + $0xb30] sm:$0xff]
    %v518 = vld [vmem:[%s1 + $0xb38] sm:$0xff]
    %v519 = vld [vmem:[%s1 + $0xb40] sm:$0xff]
    %v520 = vld [vmem:[%s1 + $0xb48] sm:$0xff]
    %v521 = vld [vmem:[%s1 + $0xb50] sm:$0xff]
    %v522 = vld [vmem:[%s1 + $0xb58] sm:$0xff]
    %v523 = vld [vmem:[%s1 + $0xb60] sm:$0xff]
    %v524 = vld [vmem:[%s1 + $0xb68] sm:$0xff]
    %v525 = vld [vmem:[%s1 + $0xb70] sm:$0xff]
    %v526 = vld [vmem:[%s1 + $0xb78] sm:$0xff]
    %v527 = vld [vmem:[%s1 + $0xb80] sm:$0xff]
    %v528 = vld [vmem:[%s1 + $0xb88] sm:$0xff]
    %v529 = vld [vmem:[%s1 + $0xb90] sm:$0xff]
    %v530 = vld [vmem:[%s1 + $0xb98] sm:$0xff]
    %v531 = vld [vmem:[%s1 + $0xba0] sm:$0xff]
    %v532 = vld [vmem:[%s1 + $0xba8] sm:$0xff]
    %v533 = vld [vmem:[%s1 + $0xbb0] sm:$0xff]
    %v534 = vld [vmem:[%s1 + $0xbb8] sm:$0xff]
    %v535 = vld [vmem:[%s1 + $0xbc0] sm:$0xff]
    %v536 = vld [vmem:[%s1 + $0xbc8] sm:$0xff]
    %v537 = vld [vmem:[%s1 + $0xbd0] sm:$0xff]
    %v538 = vld [vmem:[%s1 + $0xbd8] sm:$0xff]
    %v539 = vld [vmem:[%s1 + $0xbe0] sm:$0xff]
    %v540 = vld [vmem:[%s1 + $0xbe8] sm:$0xff]
    %v541 = vld [vmem:[%s1 + $0xbf0] sm:$0xff]
    %v542 = vld [vmem:[%s1 + $0xbf8] sm:$0xff]
    %v543 = vld [vmem:[%s2] sm:$0xf]
    %v545 = vlaneseq
    %v546 = vshrl.u32 %v545, 7
    %v547 = vsub.s32 0, %v546
    %v548 = vrot.slane %v543, %v547
    %v549 = vlaneseq
    %v550 = vshrl.u32 %v549, 7
    %v551 = vsub.s32 1, %v550
    %v552 = vrot.slane %v543, %v551
    %v553 = vlaneseq
    %v554 = vshrl.u32 %v553, 7
    %v555 = vsub.s32 2, %v554
    %v556 = vrot.slane %v543, %v555
    %v557 = vlaneseq
    %v558 = vshrl.u32 %v557, 7
    %v559 = vsub.s32 3, %v558
    %v560 = vrot.slane %v543, %v559
    %565 = vmatprep.subr.mxu0 %v160
    %566 = vmatpush1.xpose.msra.mxu0 %v159
    %567 = vmatprep.subr.mxu0 %v166
    %568 = vmatpush1.xpose.msra.mxu0 %v165
    %569 = vmatprep.subr.mxu0 %v172
    %570 = vmatpush1.xpose.msra.mxu0 %v171
    %571 = vmatprep.subr.mxu0 %v178
    %572 = vmatpush1.xpose.msra.mxu0 %v177
    %573 = vmatprep.subr.mxu0 %v184
    %574 = vmatpush1.xpose.msra.mxu0 %v183
    %575 = vmatprep.subr.mxu0 %v190
    %576 = vmatpush1.xpose.msra.mxu0 %v189
    %577 = vmatprep.subr.mxu0 %v196
    %578 = vmatpush1.xpose.msra.mxu0 %v195
    %579 = vmatprep.subr.mxu0 %v202
    %580 = vmatpush1.xpose.msra.mxu0 %v201
    %581 = vmatprep.subr.mxu0 %v208
    %582 = vmatpush1.xpose.msra.mxu0 %v207
    %583 = vmatprep.subr.mxu0 %v214
    %584 = vmatpush1.xpose.msra.mxu0 %v213
    %585 = vmatprep.subr.mxu0 %v220
    %586 = vmatpush1.xpose.msra.mxu0 %v219
    %587 = vmatprep.subr.mxu0 %v226
    %588 = vmatpush1.xpose.msra.mxu0 %v225
    %589 = vmatprep.subr.mxu0 %v232
    %590 = vmatpush1.xpose.msra.mxu0 %v231
    %591 = vmatprep.subr.mxu0 %v238
    %592 = vmatpush1.xpose.msra.mxu0 %v237
    %593 = vmatprep.subr.mxu0 %v244
    %594 = vmatpush1.xpose.msra.mxu0 %v243
    %595 = vmatprep.subr.mxu0 %v250
    %596 = vmatpush1.xpose.msra.mxu0 %v249
    %597 = vmatprep.subr.mxu0 %v256
    %598 = vmatpush1.xpose.msra.mxu0 %v255
    %599 = vmatprep.subr.mxu0 %v262
    %600 = vmatpush1.xpose.msra.mxu0 %v261
    %601 = vmatprep.subr.mxu0 %v268
    %602 = vmatpush1.xpose.msra.mxu0 %v267
    %603 = vmatprep.subr.mxu0 %v274
    %604 = vmatpush1.xpose.msra.mxu0 %v273
    %605 = vmatprep.subr.mxu0 %v280
    %606 = vmatpush1.xpose.msra.mxu0 %v279
    %607 = vmatprep.subr.mxu0 %v286
    %608 = vmatpush1.xpose.msra.mxu0 %v285
    %609 = vmatprep.subr.mxu0 %v292
    %610 = vmatpush1.xpose.msra.mxu0 %v291
    %611 = vmatprep.subr.mxu0 %v298
    %612 = vmatpush1.xpose.msra.mxu0 %v297
    %613 = vmatprep.subr.mxu0 %v304
    %614 = vmatpush1.xpose.msra.mxu0 %v303
    %615 = vmatprep.subr.mxu0 %v310
    %616 = vmatpush1.xpose.msra.mxu0 %v309
    %617 = vmatprep.subr.mxu0 %v316
    %618 = vmatpush1.xpose.msra.mxu0 %v315
    %619 = vmatprep.subr.mxu0 %v322
    %620 = vmatpush1.xpose.msra.mxu0 %v321
    %621 = vmatprep.subr.mxu0 %v328
    %622 = vmatpush1.xpose.msra.mxu0 %v327
    %623 = vmatprep.subr.mxu0 %v334
    %624 = vmatpush1.xpose.msra.mxu0 %v333
    %625 = vmatprep.subr.mxu0 %v340
    %626 = vmatpush1.xpose.msra.mxu0 %v339
    %627 = vmatprep.subr.mxu0 %v346
    %628 = vmatpush1.xpose.msra.mxu0 %v345
    %629 = vmatprep.mubr.f32.mxu0 %v16
    %630 = vmatmul.mubr.f32.gmra.mrb[0].mxu0 %v15
    %v631 = vpop.f32.mrb[0].mxu0
    %v632 = vadd.f32 %v548, %v631
    %v633 = vpop.f32.mrb[0].mxu0
    %v634 = vadd.f32 %v552, %v633
    %635 = vmatprep.mubr.f32.mxu0 %v22
    %636 = vmatmul.mubr.f32.gmra.mrb[0].mxu0 %v21
    %v637 = vpop.f32.mrb[0].mxu0
    %v638 = vadd.f32 %v548, %v637
    %v639 = vpop.f32.mrb[0].mxu0
    %v640 = vadd.f32 %v552, %v639
    %641 = vmatprep.mubr.f32.mxu0 %v28
    %642 = vmatmul.mubr.f32.gmra.mrb[0].mxu0 %v27
    %v643 = vpop.f32.mrb[0].mxu0
    %v644 = vadd.f32 %v548, %v643
    %v645 = vpop.f32.mrb[0].mxu0
    %v646 = vadd.f32 %v552, %v645
    %647 = vmatprep.mubr.f32.mxu0 %v34
    %648 = vmatmul.mubr.f32.gmra.mrb[0].mxu0 %v33
    %v649 = vpop.f32.mrb[0].mxu0
    %v650 = vadd.f32 %v548, %v649
    %v651 = vpop.f32.mrb[0].mxu0
    %v652 = vadd.f32 %v552, %v651
    %653 = vmatprep.mubr.f32.mxu0 %v40
    %654 = vmatmul.mubr.f32.gmra.mrb[0].mxu0 %v39
    %v655 = vpop.f32.mrb[0].mxu0
    %v656 = vadd.f32 %v548, %v655
    %v657 = vpop.f32.mrb[0].mxu0
    %v658 = vadd.f32 %v552, %v657
    %659 = vmatprep.mubr.f32.mxu0 %v46
    %660 = vmatmul.mubr.f32.gmra.mrb[0].mxu0 %v45
    %v661 = vpop.f32.mrb[0].mxu0
    %v662 = vadd.f32 %v548, %v661
    %v663 = vpop.f32.mrb[0].mxu0
    %v664 = vadd.f32 %v552, %v663
    %665 = vmatprep.mubr.f32.mxu0 %v52
    %666 = vmatmul.mubr.f32.gmra.mrb[0].mxu0 %v51
    %v667 = vpop.f32.mrb[0].mxu0
    %v668 = vadd.f32 %v548, %v667
    %v669 = vpop.f32.mrb[0].mxu0
    %v670 = vadd.f32 %v552, %v669
    %671 = vmatprep.mubr.f32.mxu0 %v58
    %672 = vmatmul.mubr.f32.gmra.mrb[0].mxu0 %v57
    %v673 = vpop.f32.mrb[0].mxu0
    %v674 = vadd.f32 %v548, %v673
    %v675 = vpop.f32.mrb[0].mxu0
    %v676 = vadd.f32 %v552, %v675
    %677 = vmatprep.mubr.f32.mxu0 %v64
    %678 = vmatmul.mubr.f32.gmra.mrb[0].mxu0 %v63
    %v679 = vpop.f32.mrb[0].mxu0
    %v680 = vadd.f32 %v548, %v679
    %v681 = vpop.f32.mrb[0].mxu0
    %v682 = vadd.f32 %v552, %v681
    %683 = vmatprep.mubr.f32.mxu0 %v70
    %684 = vmatmul.mubr.f32.gmra.mrb[0].mxu0 %v69
    %v685 = vpop.f32.mrb[0].mxu0
    %v686 = vadd.f32 %v548, %v685
    %v687 = vpop.f32.mrb[0].mxu0
    %v688 = vadd.f32 %v552, %v687
    %689 = vmatprep.mubr.f32.mxu0 %v76
    %690 = vmatmul.mubr.f32.gmra.mrb[0].mxu0 %v75
    %v691 = vpop.f32.mrb[0].mxu0
    %v692 = vadd.f32 %v548, %v691
    %v693 = vpop.f32.mrb[0].mxu0
    %v694 = vadd.f32 %v552, %v693
    %695 = vmatprep.mubr.f32.mxu0 %v82
    %696 = vmatmul.mubr.f32.gmra.mrb[0].mxu0 %v81
    %v697 = vpop.f32.mrb[0].mxu0
    %v698 = vadd.f32 %v548, %v697
    %v699 = vpop.f32.mrb[0].mxu0
    %v700 = vadd.f32 %v552, %v699
    %701 = vmatprep.mubr.f32.mxu0 %v88
    %702 = vmatmul.mubr.f32.gmra.mrb[0].mxu0 %v87
    %v703 = vpop.f32.mrb[0].mxu0
    %v704 = vadd.f32 %v548, %v703
    %v705 = vpop.f32.mrb[0].mxu0
    %v706 = vadd.f32 %v552, %v705
    %707 = vmatprep.mubr.f32.mxu0 %v94
    %708 = vmatmul.mubr.f32.gmra.mrb[0].mxu0 %v93
    %v709 = vpop.f32.mrb[0].mxu0
    %v710 = vadd.f32 %v548, %v709
    %v711 = vpop.f32.mrb[0].mxu0
    %v712 = vadd.f32 %v552, %v711
    %713 = vmatprep.mubr.f32.mxu0 %v100
    %714 = vmatmul.mubr.f32.gmra.mrb[0].mxu0 %v99
    %v715 = vpop.f32.mrb[0].mxu0
    %v716 = vadd.f32 %v548, %v715
    %v717 = vpop.f32.mrb[0].mxu0
    %v718 = vadd.f32 %v552, %v717
    %719 = vmatprep.mubr.f32.mxu0 %v106
    %720 = vmatmul.mubr.f32.gmra.mrb[0].mxu0 %v105
    %v721 = vpop.f32.mrb[0].mxu0
    %v722 = vadd.f32 %v548, %v721
    %v723 = vpop.f32.mrb[0].mxu0
    %v724 = vadd.f32 %v552, %v723
    %725 = vmatprep.mubr.f32.mxu0 %v112
    %726 = vmatmul.mubr.f32.gmra.mrb[0].mxu0 %v111
    %v727 = vpop.f32.mrb[0].mxu0
    %v728 = vadd.f32 %v548, %v727
    %v729 = vpop.f32.mrb[0].mxu0
    %v730 = vadd.f32 %v552, %v729
    %731 = vmatprep.mubr.f32.mxu0 %v118
    %732 = vmatmul.mubr.f32.gmra.mrb[0].mxu0 %v117
    %v733 = vpop.f32.mrb[0].mxu0
    %v734 = vadd.f32 %v548, %v733
    %v735 = vpop.f32.mrb[0].mxu0
    %v736 = vadd.f32 %v552, %v735
    %737 = vmatprep.mubr.f32.mxu0 %v124
    %738 = vmatmul.mubr.f32.gmra.mrb[0].mxu0 %v123
    %v739 = vpop.f32.mrb[0].mxu0
    %v740 = vadd.f32 %v548, %v739
    %v741 = vpop.f32.mrb[0].mxu0
    %v742 = vadd.f32 %v552, %v741
    %743 = vmatprep.mubr.f32.mxu0 %v130
    %744 = vmatmul.mubr.f32.gmra.mrb[0].mxu0 %v129
    %v745 = vpop.f32.mrb[0].mxu0
    %v746 = vadd.f32 %v548, %v745
    %v747 = vpop.f32.mrb[0].mxu0
    %v748 = vadd.f32 %v552, %v747
    %749 = vmatprep.mubr.f32.mxu0 %v136
    %750 = vmatmul.mubr.f32.gmra.mrb[0].mxu0 %v135
    %v751 = vpop.f32.mrb[0].mxu0
    %v752 = vadd.f32 %v548, %v751
    %v753 = vpop.f32.mrb[0].mxu0
    %v754 = vadd.f32 %v552, %v753
    %755 = vmatprep.mubr.f32.mxu0 %v142
    %756 = vmatmul.mubr.f32.gmra.mrb[0].mxu0 %v141
    %v757 = vpop.f32.mrb[0].mxu0
    %v758 = vadd.f32 %v548, %v757
    %v759 = vpop.f32.mrb[0].mxu0
    %v760 = vadd.f32 %v552, %v759
    %761 = vmatprep.mubr.f32.mxu0 %v148
    %762 = vmatmul.mubr.f32.gmra.mrb[0].mxu0 %v147
    %v763 = vpop.f32.mrb[0].mxu0
    %v764 = vadd.f32 %v548, %v763
    %v765 = vpop.f32.mrb[0].mxu0
    %v766 = vadd.f32 %v552, %v765
    %767 = vmatprep.mubr.f32.mxu0 %v154
    %768 = vmatmul.mubr.f32.gmra.mrb[0].mxu0 %v153
    %v769 = vpop.f32.mrb[0].mxu0
    %v770 = vadd.f32 %v548, %v769
    %v771 = vpop.f32.mrb[0].mxu0
    %v772 = vadd.f32 %v552, %v771
    %773 = vdwg.mxu0
    %774 = vmatprep.subr.mxu0 %v162
    %775 = vmatpush1.xpose.msra.mxu0 %v161
    %776 = vmatprep.subr.mxu0 %v168
    %777 = vmatpush1.xpose.msra.mxu0 %v167
    %778 = vmatprep.subr.mxu0 %v174
    %779 = vmatpush1.xpose.msra.mxu0 %v173
    %780 = vmatprep.subr.mxu0 %v180
    %781 = vmatpush1.xpose.msra.mxu0 %v179
    %782 = vmatprep.subr.mxu0 %v186
    %783 = vmatpush1.xpose.msra.mxu0 %v185
    %784 = vmatprep.subr.mxu0 %v192
    %785 = vmatpush1.xpose.msra.mxu0 %v191
    %786 = vmatprep.subr.mxu0 %v198
    %787 = vmatpush1.xpose.msra.mxu0 %v197
    %788 = vmatprep.subr.mxu0 %v204
    %789 = vmatpush1.xpose.msra.mxu0 %v203
    %790 = vmatprep.subr.mxu0 %v210
    %791 = vmatpush1.xpose.msra.mxu0 %v209
    %792 = vmatprep.subr.mxu0 %v216
    %793 = vmatpush1.xpose.msra.mxu0 %v215
    %794 = vmatprep.subr.mxu0 %v222
    %795 = vmatpush1.xpose.msra.mxu0 %v221
    %796 = vmatprep.subr.mxu0 %v228
    %797 = vmatpush1.xpose.msra.mxu0 %v227
    %798 = vmatprep.subr.mxu0 %v234
    %799 = vmatpush1.xpose.msra.mxu0 %v233
    %800 = vmatprep.subr.mxu0 %v240
    %801 = vmatpush1.xpose.msra.mxu0 %v239
    %802 = vmatprep.subr.mxu0 %v246
    %803 = vmatpush1.xpose.msra.mxu0 %v245
    %804 = vmatprep.subr.mxu0 %v252
    %805 = vmatpush1.xpose.msra.mxu0 %v251
    %806 = vmatprep.subr.mxu0 %v258
    %807 = vmatpush1.xpose.msra.mxu0 %v257
    %808 = vmatprep.subr.mxu0 %v264
    %809 = vmatpush1.xpose.msra.mxu0 %v263
    %810 = vmatprep.subr.mxu0 %v270
    %811 = vmatpush1.xpose.msra.mxu0 %v269
    %812 = vmatprep.subr.mxu0 %v276
    %813 = vmatpush1.xpose.msra.mxu0 %v275
    %814 = vmatprep.subr.mxu0 %v282
    %815 = vmatpush1.xpose.msra.mxu0 %v281
    %816 = vmatprep.subr.mxu0 %v288
    %817 = vmatpush1.xpose.msra.mxu0 %v287
    %818 = vmatprep.subr.mxu0 %v294
    %819 = vmatpush1.xpose.msra.mxu0 %v293
    %820 = vmatprep.subr.mxu0 %v300
    %821 = vmatpush1.xpose.msra.mxu0 %v299
    %822 = vmatprep.subr.mxu0 %v306
    %823 = vmatpush1.xpose.msra.mxu0 %v305
    %824 = vmatprep.subr.mxu0 %v312
    %825 = vmatpush1.xpose.msra.mxu0 %v311
    %826 = vmatprep.subr.mxu0 %v318
    %827 = vmatpush1.xpose.msra.mxu0 %v317
    %828 = vmatprep.subr.mxu0 %v324
    %829 = vmatpush1.xpose.msra.mxu0 %v323
    %830 = vmatprep.subr.mxu0 %v330
    %831 = vmatpush1.xpose.msra.mxu0 %v329
    %832 = vmatprep.subr.mxu0 %v336
    %833 = vmatpush1.xpose.msra.mxu0 %v335
    %834 = vmatprep.subr.mxu0 %v342
    %835 = vmatpush1.xpose.msra.mxu0 %v341
    %836 = vmatprep.subr.mxu0 %v348
    %837 = vmatpush1.xpose.msra.mxu0 %v347
    %838 = vmatprep.mubr.f32.mxu0 %v18
    %839 = vmatmul.mubr.f32.gmra.mrb[0].mxu0 %v17
    %v840 = vpop.f32.mrb[0].mxu0
    %v841 = vadd.f32 %v632, %v840
    %v842 = vpop.f32.mrb[0].mxu0
    %v843 = vadd.f32 %v634, %v842
    %844 = vmatprep.mubr.f32.mxu0 %v24
    %845 = vmatmul.mubr.f32.gmra.mrb[0].mxu0 %v23
    %v846 = vpop.f32.mrb[0].mxu0
    %v847 = vadd.f32 %v638, %v846
    %v848 = vpop.f32.mrb[0].mxu0
    %v849 = vadd.f32 %v640, %v848
    %850 = vmatprep.mubr.f32.mxu0 %v30
    %851 = vmatmul.mubr.f32.gmra.mrb[0].mxu0 %v29
    %v852 = vpop.f32.mrb[0].mxu0
    %v853 = vadd.f32 %v644, %v852
    %v854 = vpop.f32.mrb[0].mxu0
    %v855 = vadd.f32 %v646, %v854
    %856 = vmatprep.mubr.f32.mxu0 %v36
    %857 = vmatmul.mubr.f32.gmra.mrb[0].mxu0 %v35
    %v858 = vpop.f32.mrb[0].mxu0
    %v859 = vadd.f32 %v650, %v858
    %v860 = vpop.f32.mrb[0].mxu0
    %v861 = vadd.f32 %v652, %v860
    %862 = vmatprep.mubr.f32.mxu0 %v42
    %863 = vmatmul.mubr.f32.gmra.mrb[0].mxu0 %v41
    %v864 = vpop.f32.mrb[0].mxu0
    %v865 = vadd.f32 %v656, %v864
    %v866 = vpop.f32.mrb[0].mxu0
    %v867 = vadd.f32 %v658, %v866
    %868 = vmatprep.mubr.f32.mxu0 %v48
    %869 = vmatmul.mubr.f32.gmra.mrb[0].mxu0 %v47
    %v870 = vpop.f32.mrb[0].mxu0
    %v871 = vadd.f32 %v662, %v870
    %v872 = vpop.f32.mrb[0].mxu0
    %v873 = vadd.f32 %v664, %v872
    %874 = vmatprep.mubr.f32.mxu0 %v54
    %875 = vmatmul.mubr.f32.gmra.mrb[0].mxu0 %v53
    %v876 = vpop.f32.mrb[0].mxu0
    %v877 = vadd.f32 %v668, %v876
    %v878 = vpop.f32.mrb[0].mxu0
    %v879 = vadd.f32 %v670, %v878
    %880 = vmatprep.mubr.f32.mxu0 %v60
    %881 = vmatmul.mubr.f32.gmra.mrb[0].mxu0 %v59
    %v882 = vpop.f32.mrb[0].mxu0
    %v883 = vadd.f32 %v674, %v882
    %v884 = vpop.f32.mrb[0].mxu0
    %v885 = vadd.f32 %v676, %v884
    %886 = vmatprep.mubr.f32.mxu0 %v66
    %887 = vmatmul.mubr.f32.gmra.mrb[0].mxu0 %v65
    %v888 = vpop.f32.mrb[0].mxu0
    %v889 = vadd.f32 %v680, %v888
    %v890 = vpop.f32.mrb[0].mxu0
    %v891 = vadd.f32 %v682, %v890
    %892 = vmatprep.mubr.f32.mxu0 %v72
    %893 = vmatmul.mubr.f32.gmra.mrb[0].mxu0 %v71
    %v894 = vpop.f32.mrb[0].mxu0
    %v895 = vadd.f32 %v686, %v894
    %v896 = vpop.f32.mrb[0].mxu0
    %v897 = vadd.f32 %v688, %v896
    %898 = vmatprep.mubr.f32.mxu0 %v78
    %899 = vmatmul.mubr.f32.gmra.mrb[0].mxu0 %v77
    %v900 = vpop.f32.mrb[0].mxu0
    %v901 = vadd.f32 %v692, %v900
    %v902 = vpop.f32.mrb[0].mxu0
    %v903 = vadd.f32 %v694, %v902
    %904 = vmatprep.mubr.f32.mxu0 %v84
    %905 = vmatmul.mubr.f32.gmra.mrb[0].mxu0 %v83
    %v906 = vpop.f32.mrb[0].mxu0
    %v907 = vadd.f32 %v698, %v906
    %v908 = vpop.f32.mrb[0].mxu0
    %v909 = vadd.f32 %v700, %v908
    %910 = vmatprep.mubr.f32.mxu0 %v90
    %911 = vmatmul.mubr.f32.gmra.mrb[0].mxu0 %v89
    %v912 = vpop.f32.mrb[0].mxu0
    %v913 = vadd.f32 %v704, %v912
    %v914 = vpop.f32.mrb[0].mxu0
    %v915 = vadd.f32 %v706, %v914
    %916 = vmatprep.mubr.f32.mxu0 %v96
    %917 = vmatmul.mubr.f32.gmra.mrb[0].mxu0 %v95
    %v918 = vpop.f32.mrb[0].mxu0
    %v919 = vadd.f32 %v710, %v918
    %v920 = vpop.f32.mrb[0].mxu0
    %v921 = vadd.f32 %v712, %v920
    %922 = vmatprep.mubr.f32.mxu0 %v102
    %923 = vmatmul.mubr.f32.gmra.mrb[0].mxu0 %v101
    %v924 = vpop.f32.mrb[0].mxu0
    %v925 = vadd.f32 %v716, %v924
    %v926 = vpop.f32.mrb[0].mxu0
    %v927 = vadd.f32 %v718, %v926
    %928 = vmatprep.mubr.f32.mxu0 %v108
    %929 = vmatmul.mubr.f32.gmra.mrb[0].mxu0 %v107
    %v930 = vpop.f32.mrb[0].mxu0
    %v931 = vadd.f32 %v722, %v930
    %v932 = vpop.f32.mrb[0].mxu0
    %v933 = vadd.f32 %v724, %v932
    %934 = vmatprep.mubr.f32.mxu0 %v114
    %935 = vmatmul.mubr.f32.gmra.mrb[0].mxu0 %v113
    %v936 = vpop.f32.mrb[0].mxu0
    %v937 = vadd.f32 %v728, %v936
    %v938 = vpop.f32.mrb[0].mxu0
    %v939 = vadd.f32 %v730, %v938
    %940 = vmatprep.mubr.f32.mxu0 %v120
    %941 = vmatmul.mubr.f32.gmra.mrb[0].mxu0 %v119
    %v942 = vpop.f32.mrb[0].mxu0
    %v943 = vadd.f32 %v734, %v942
    %v944 = vpop.f32.mrb[0].mxu0
    %v945 = vadd.f32 %v736, %v944
    %946 = vmatprep.mubr.f32.mxu0 %v126
    %947 = vmatmul.mubr.f32.gmra.mrb[0].mxu0 %v125
    %v948 = vpop.f32.mrb[0].mxu0
    %v949 = vadd.f32 %v740, %v948
    %v950 = vpop.f32.mrb[0].mxu0
    %v951 = vadd.f32 %v742, %v950
    %952 = vmatprep.mubr.f32.mxu0 %v132
    %953 = vmatmul.mubr.f32.gmra.mrb[0].mxu0 %v131
    %v954 = vpop.f32.mrb[0].mxu0
    %v955 = vadd.f32 %v746, %v954
    %v956 = vpop.f32.mrb[0].mxu0
    %v957 = vadd.f32 %v748, %v956
    %958 = vmatprep.mubr.f32.mxu0 %v138
    %959 = vmatmul.mubr.f32.gmra.mrb[0].mxu0 %v137
    %v960 = vpop.f32.mrb[0].mxu0
    %v961 = vadd.f32 %v752, %v960
    %v962 = vpop.f32.mrb[0].mxu0
    %v963 = vadd.f32 %v754, %v962
    %964 = vmatprep.mubr.f32.mxu0 %v144
    %965 = vmatmul.mubr.f32.gmra.mrb[0].mxu0 %v143
    %v966 = vpop.f32.mrb[0].mxu0
    %v967 = vadd.f32 %v758, %v966
    %v968 = vpop.f32.mrb[0].mxu0
    %v969 = vadd.f32 %v760, %v968
    %970 = vmatprep.mubr.f32.mxu0 %v150
    %971 = vmatmul.mubr.f32.gmra.mrb[0].mxu0 %v149
    %v972 = vpop.f32.mrb[0].mxu0
    %v973 = vadd.f32 %v764, %v972
    %v974 = vpop.f32.mrb[0].mxu0
    %v975 = vadd.f32 %v766, %v974
    %976 = vmatprep.mubr.f32.mxu0 %v156
    %977 = vmatmul.mubr.f32.gmra.mrb[0].mxu0 %v155
    %v978 = vpop.f32.mrb[0].mxu0
    %v979 = vadd.f32 %v770, %v978
    %v980 = vpop.f32.mrb[0].mxu0
    %v981 = vadd.f32 %v772, %v980
    %982 = vdwg.mxu0
    %983 = vmatprep.subr.mxu0 %v164
    %984 = vmatpush1.xpose.msra.mxu0 %v163
    %985 = vmatprep.subr.mxu0 %v170
    %986 = vmatpush1.xpose.msra.mxu0 %v169
    %987 = vmatprep.subr.mxu0 %v176
    %988 = vmatpush1.xpose.msra.mxu0 %v175
    %989 = vmatprep.subr.mxu0 %v182
    %990 = vmatpush1.xpose.msra.mxu0 %v181
    %991 = vmatprep.subr.mxu0 %v188
    %992 = vmatpush1.xpose.msra.mxu0 %v187
    %993 = vmatprep.subr.mxu0 %v194
    %994 = vmatpush1.xpose.msra.mxu0 %v193
    %995 = vmatprep.subr.mxu0 %v200
    %996 = vmatpush1.xpose.msra.mxu0 %v199
    %997 = vmatprep.subr.mxu0 %v206
    %998 = vmatpush1.xpose.msra.mxu0 %v205
    %999 = vmatprep.subr.mxu0 %v212
    %1000 = vmatpush1.xpose.msra.mxu0 %v211
    %1001 = vmatprep.subr.mxu0 %v218
    %1002 = vmatpush1.xpose.msra.mxu0 %v217
    %1003 = vmatprep.subr.mxu0 %v224
    %1004 = vmatpush1.xpose.msra.mxu0 %v223
    %1005 = vmatprep.subr.mxu0 %v230
    %1006 = vmatpush1.xpose.msra.mxu0 %v229
    %1007 = vmatprep.subr.mxu0 %v236
    %1008 = vmatpush1.xpose.msra.mxu0 %v235
    %1009 = vmatprep.subr.mxu0 %v242
    %1010 = vmatpush1.xpose.msra.mxu0 %v241
    %1011 = vmatprep.subr.mxu0 %v248
    %1012 = vmatpush1.xpose.msra.mxu0 %v247
    %1013 = vmatprep.subr.mxu0 %v254
    %1014 = vmatpush1.xpose.msra.mxu0 %v253
    %1015 = vmatprep.subr.mxu0 %v260
    %1016 = vmatpush1.xpose.msra.mxu0 %v259
    %1017 = vmatprep.subr.mxu0 %v266
    %1018 = vmatpush1.xpose.msra.mxu0 %v265
    %1019 = vmatprep.subr.mxu0 %v272
    %1020 = vmatpush1.xpose.msra.mxu0 %v271
    %1021 = vmatprep.subr.mxu0 %v278
    %1022 = vmatpush1.xpose.msra.mxu0 %v277
    %1023 = vmatprep.subr.mxu0 %v284
    %1024 = vmatpush1.xpose.msra.mxu0 %v283
    %1025 = vmatprep.subr.mxu0 %v290
    %1026 = vmatpush1.xpose.msra.mxu0 %v289
    %1027 = vmatprep.subr.mxu0 %v296
    %1028 = vmatpush1.xpose.msra.mxu0 %v295
    %1029 = vmatprep.subr.mxu0 %v302
    %1030 = vmatpush1.xpose.msra.mxu0 %v301
    %1031 = vmatprep.subr.mxu0 %v308
    %1032 = vmatpush1.xpose.msra.mxu0 %v307
    %1033 = vmatprep.subr.mxu0 %v314
    %1034 = vmatpush1.xpose.msra.mxu0 %v313
    %1035 = vmatprep.subr.mxu0 %v320
    %1036 = vmatpush1.xpose.msra.mxu0 %v319
    %1037 = vmatprep.subr.mxu0 %v326
    %1038 = vmatpush1.xpose.msra.mxu0 %v325
    %1039 = vmatprep.subr.mxu0 %v332
    %1040 = vmatpush1.xpose.msra.mxu0 %v331
    %1041 = vmatprep.subr.mxu0 %v338
    %1042 = vmatpush1.xpose.msra.mxu0 %v337
    %1043 = vmatprep.subr.mxu0 %v344
    %1044 = vmatpush1.xpose.msra.mxu0 %v343
    %1045 = vmatprep.subr.mxu0 %v350
    %1046 = vmatpush1.xpose.msra.mxu0 %v349
    %1047 = vmatprep.mubr.f32.mxu0 %v20
    %1048 = vmatmul.mubr.f32.gmra.mrb[0].mxu0 %v19
    %v1049 = vpop.f32.mrb[0].mxu0
    %v1050 = vadd.f32 %v841, %v1049
    %v1051 = vpop.f32.mrb[0].mxu0
    %v1052 = vadd.f32 %v843, %v1051
    %1053 = vmatprep.mubr.f32.mxu0 %v26
    %1054 = vmatmul.mubr.f32.gmra.mrb[0].mxu0 %v25
    %v1055 = vpop.f32.mrb[0].mxu0
    %v1056 = vadd.f32 %v847, %v1055
    %v1057 = vpop.f32.mrb[0].mxu0
    %v1058 = vadd.f32 %v849, %v1057
    %1059 = vmatprep.mubr.f32.mxu0 %v32
    %1060 = vmatmul.mubr.f32.gmra.mrb[0].mxu0 %v31
    %v1061 = vpop.f32.mrb[0].mxu0
    %v1062 = vadd.f32 %v853, %v1061
    %v1063 = vpop.f32.mrb[0].mxu0
    %v1064 = vadd.f32 %v855, %v1063
    %1065 = vmatprep.mubr.f32.mxu0 %v38
    %1066 = vmatmul.mubr.f32.gmra.mrb[0].mxu0 %v37
    %v1067 = vpop.f32.mrb[0].mxu0
    %v1068 = vadd.f32 %v859, %v1067
    %v1069 = vpop.f32.mrb[0].mxu0
    %v1070 = vadd.f32 %v861, %v1069
    %1071 = vmatprep.mubr.f32.mxu0 %v44
    %1072 = vmatmul.mubr.f32.gmra.mrb[0].mxu0 %v43
    %v1073 = vpop.f32.mrb[0].mxu0
    %v1074 = vadd.f32 %v865, %v1073
    %v1075 = vpop.f32.mrb[0].mxu0
    %v1076 = vadd.f32 %v867, %v1075
    %1077 = vmatprep.mubr.f32.mxu0 %v50
    %1078 = vmatmul.mubr.f32.gmra.mrb[0].mxu0 %v49
    %v1079 = vpop.f32.mrb[0].mxu0
    %v1080 = vadd.f32 %v871, %v1079
    %v1081 = vpop.f32.mrb[0].mxu0
    %v1082 = vadd.f32 %v873, %v1081
    %1083 = vmatprep.mubr.f32.mxu0 %v56
    %1084 = vmatmul.mubr.f32.gmra.mrb[0].mxu0 %v55
    %v1085 = vpop.f32.mrb[0].mxu0
    %v1086 = vadd.f32 %v877, %v1085
    %v1087 = vpop.f32.mrb[0].mxu0
    %v1088 = vadd.f32 %v879, %v1087
    %1089 = vmatprep.mubr.f32.mxu0 %v62
    %1090 = vmatmul.mubr.f32.gmra.mrb[0].mxu0 %v61
    %v1091 = vpop.f32.mrb[0].mxu0
    %v1092 = vadd.f32 %v883, %v1091
    %v1093 = vpop.f32.mrb[0].mxu0
    %v1094 = vadd.f32 %v885, %v1093
    %1095 = vmatprep.mubr.f32.mxu0 %v68
    %1096 = vmatmul.mubr.f32.gmra.mrb[0].mxu0 %v67
    %v1097 = vpop.f32.mrb[0].mxu0
    %v1098 = vadd.f32 %v889, %v1097
    %v1099 = vpop.f32.mrb[0].mxu0
    %v1100 = vadd.f32 %v891, %v1099
    %1101 = vmatprep.mubr.f32.mxu0 %v74
    %1102 = vmatmul.mubr.f32.gmra.mrb[0].mxu0 %v73
    %v1103 = vpop.f32.mrb[0].mxu0
    %v1104 = vadd.f32 %v895, %v1103
    %v1105 = vpop.f32.mrb[0].mxu0
    %v1106 = vadd.f32 %v897, %v1105
    %1107 = vmatprep.mubr.f32.mxu0 %v80
    %1108 = vmatmul.mubr.f32.gmra.mrb[0].mxu0 %v79
    %v1109 = vpop.f32.mrb[0].mxu0
    %v1110 = vadd.f32 %v901, %v1109
    %v1111 = vpop.f32.mrb[0].mxu0
    %v1112 = vadd.f32 %v903, %v1111
    %1113 = vmatprep.mubr.f32.mxu0 %v86
    %1114 = vmatmul.mubr.f32.gmra.mrb[0].mxu0 %v85
    %v1115 = vpop.f32.mrb[0].mxu0
    %v1116 = vadd.f32 %v907, %v1115
    %v1117 = vpop.f32.mrb[0].mxu0
    %v1118 = vadd.f32 %v909, %v1117
    %1119 = vmatprep.mubr.f32.mxu0 %v92
    %1120 = vmatmul.mubr.f32.gmra.mrb[0].mxu0 %v91
    %v1121 = vpop.f32.mrb[0].mxu0
    %v1122 = vadd.f32 %v913, %v1121
    %v1123 = vpop.f32.mrb[0].mxu0
    %v1124 = vadd.f32 %v915, %v1123
    %1125 = vmatprep.mubr.f32.mxu0 %v98
    %1126 = vmatmul.mubr.f32.gmra.mrb[0].mxu0 %v97
    %v1127 = vpop.f32.mrb[0].mxu0
    %v1128 = vadd.f32 %v919, %v1127
    %v1129 = vpop.f32.mrb[0].mxu0
    %v1130 = vadd.f32 %v921, %v1129
    %1131 = vmatprep.mubr.f32.mxu0 %v104
    %1132 = vmatmul.mubr.f32.gmra.mrb[0].mxu0 %v103
    %v1133 = vpop.f32.mrb[0].mxu0
    %v1134 = vadd.f32 %v925, %v1133
    %v1135 = vpop.f32.mrb[0].mxu0
    %v1136 = vadd.f32 %v927, %v1135
    %1137 = vmatprep.mubr.f32.mxu0 %v110
    %1138 = vmatmul.mubr.f32.gmra.mrb[0].mxu0 %v109
    %v1139 = vpop.f32.mrb[0].mxu0
    %v1140 = vadd.f32 %v931, %v1139
    %v1141 = vpop.f32.mrb[0].mxu0
    %v1142 = vadd.f32 %v933, %v1141
    %1143 = vmatprep.mubr.f32.mxu0 %v116
    %1144 = vmatmul.mubr.f32.gmra.mrb[0].mxu0 %v115
    %v1145 = vpop.f32.mrb[0].mxu0
    %v1146 = vadd.f32 %v937, %v1145
    %v1147 = vpop.f32.mrb[0].mxu0
    %v1148 = vadd.f32 %v939, %v1147
    %1149 = vmatprep.mubr.f32.mxu0 %v122
    %1150 = vmatmul.mubr.f32.gmra.mrb[0].mxu0 %v121
    %v1151 = vpop.f32.mrb[0].mxu0
    %v1152 = vadd.f32 %v943, %v1151
    %v1153 = vpop.f32.mrb[0].mxu0
    %v1154 = vadd.f32 %v945, %v1153
    %1155 = vmatprep.mubr.f32.mxu0 %v128
    %1156 = vmatmul.mubr.f32.gmra.mrb[0].mxu0 %v127
    %v1157 = vpop.f32.mrb[0].mxu0
    %v1158 = vadd.f32 %v949, %v1157
    %v1159 = vpop.f32.mrb[0].mxu0
    %v1160 = vadd.f32 %v951, %v1159
    %1161 = vmatprep.mubr.f32.mxu0 %v134
    %1162 = vmatmul.mubr.f32.gmra.mrb[0].mxu0 %v133
    %v1163 = vpop.f32.mrb[0].mxu0
    %v1164 = vadd.f32 %v955, %v1163
    %v1165 = vpop.f32.mrb[0].mxu0
    %v1166 = vadd.f32 %v957, %v1165
    %1167 = vmatprep.mubr.f32.mxu0 %v140
    %1168 = vmatmul.mubr.f32.gmra.mrb[0].mxu0 %v139
    %v1169 = vpop.f32.mrb[0].mxu0
    %v1170 = vadd.f32 %v961, %v1169
    %v1171 = vpop.f32.mrb[0].mxu0
    %v1172 = vadd.f32 %v963, %v1171
    %1173 = vmatprep.mubr.f32.mxu0 %v146
    %1174 = vmatmul.mubr.f32.gmra.mrb[0].mxu0 %v145
    %v1175 = vpop.f32.mrb[0].mxu0
    %v1176 = vadd.f32 %v967, %v1175
    %v1177 = vpop.f32.mrb[0].mxu0
    %v1178 = vadd.f32 %v969, %v1177
    %1179 = vmatprep.mubr.f32.mxu0 %v152
    %1180 = vmatmul.mubr.f32.gmra.mrb[0].mxu0 %v151
    %v1181 = vpop.f32.mrb[0].mxu0
    %v1182 = vadd.f32 %v973, %v1181
    %v1183 = vpop.f32.mrb[0].mxu0
    %v1184 = vadd.f32 %v975, %v1183
    %1185 = vmatprep.mubr.f32.mxu0 %v158
    %1186 = vmatmul.mubr.f32.gmra.mrb[0].mxu0 %v157
    %v1187 = vpop.f32.mrb[0].mxu0
    %v1188 = vadd.f32 %v979, %v1187
    %v1189 = vpop.f32.mrb[0].mxu0
    %v1190 = vadd.f32 %v981, %v1189
    %1191 = vdwg.mxu0
    %1192 = vmatprep.subr.mxu0 %v352
    %1193 = vmatpush1.xpose.msra.mxu0 %v351
    %1194 = vmatprep.subr.mxu0 %v358
    %1195 = vmatpush1.xpose.msra.mxu0 %v357
    %1196 = vmatprep.subr.mxu0 %v364
    %1197 = vmatpush1.xpose.msra.mxu0 %v363
    %1198 = vmatprep.subr.mxu0 %v370
    %1199 = vmatpush1.xpose.msra.mxu0 %v369
    %1200 = vmatprep.subr.mxu0 %v376
    %1201 = vmatpush1.xpose.msra.mxu0 %v375
    %1202 = vmatprep.subr.mxu0 %v382
    %1203 = vmatpush1.xpose.msra.mxu0 %v381
    %1204 = vmatprep.subr.mxu0 %v388
    %1205 = vmatpush1.xpose.msra.mxu0 %v387
    %1206 = vmatprep.subr.mxu0 %v394
    %1207 = vmatpush1.xpose.msra.mxu0 %v393
    %1208 = vmatprep.subr.mxu0 %v400
    %1209 = vmatpush1.xpose.msra.mxu0 %v399
    %1210 = vmatprep.subr.mxu0 %v406
    %1211 = vmatpush1.xpose.msra.mxu0 %v405
    %1212 = vmatprep.subr.mxu0 %v412
    %1213 = vmatpush1.xpose.msra.mxu0 %v411
    %1214 = vmatprep.subr.mxu0 %v418
    %1215 = vmatpush1.xpose.msra.mxu0 %v417
    %1216 = vmatprep.subr.mxu0 %v424
    %1217 = vmatpush1.xpose.msra.mxu0 %v423
    %1218 = vmatprep.subr.mxu0 %v430
    %1219 = vmatpush1.xpose.msra.mxu0 %v429
    %1220 = vmatprep.subr.mxu0 %v436
    %1221 = vmatpush1.xpose.msra.mxu0 %v435
    %1222 = vmatprep.subr.mxu0 %v442
    %1223 = vmatpush1.xpose.msra.mxu0 %v441
    %1224 = vmatprep.subr.mxu0 %v448
    %1225 = vmatpush1.xpose.msra.mxu0 %v447
    %1226 = vmatprep.subr.mxu0 %v454
    %1227 = vmatpush1.xpose.msra.mxu0 %v453
    %1228 = vmatprep.subr.mxu0 %v460
    %1229 = vmatpush1.xpose.msra.mxu0 %v459
    %1230 = vmatprep.subr.mxu0 %v466
    %1231 = vmatpush1.xpose.msra.mxu0 %v465
    %1232 = vmatprep.subr.mxu0 %v472
    %1233 = vmatpush1.xpose.msra.mxu0 %v471
    %1234 = vmatprep.subr.mxu0 %v478
    %1235 = vmatpush1.xpose.msra.mxu0 %v477
    %1236 = vmatprep.subr.mxu0 %v484
    %1237 = vmatpush1.xpose.msra.mxu0 %v483
    %1238 = vmatprep.subr.mxu0 %v490
    %1239 = vmatpush1.xpose.msra.mxu0 %v489
    %1240 = vmatprep.subr.mxu0 %v496
    %1241 = vmatpush1.xpose.msra.mxu0 %v495
    %1242 = vmatprep.subr.mxu0 %v502
    %1243 = vmatpush1.xpose.msra.mxu0 %v501
    %1244 = vmatprep.subr.mxu0 %v508
    %1245 = vmatpush1.xpose.msra.mxu0 %v507
    %1246 = vmatprep.subr.mxu0 %v514
    %1247 = vmatpush1.xpose.msra.mxu0 %v513
    %1248 = vmatprep.subr.mxu0 %v520
    %1249 = vmatpush1.xpose.msra.mxu0 %v519
    %1250 = vmatprep.subr.mxu0 %v526
    %1251 = vmatpush1.xpose.msra.mxu0 %v525
    %1252 = vmatprep.subr.mxu0 %v532
    %1253 = vmatpush1.xpose.msra.mxu0 %v531
    %1254 = vmatprep.subr.mxu0 %v538
    %1255 = vmatpush1.xpose.msra.mxu0 %v537
    %1256 = vmatprep.mubr.f32.mxu0 %v16
    %1257 = vmatmul.mubr.f32.gmra.mrb[0].mxu0 %v15
    %v1258 = vpop.f32.mrb[0].mxu0
    %v1259 = vadd.f32 %v556, %v1258
    %v1260 = vpop.f32.mrb[0].mxu0
    %v1261 = vadd.f32 %v560, %v1260
    %1262 = vmatprep.mubr.f32.mxu0 %v22
    %1263 = vmatmul.mubr.f32.gmra.mrb[0].mxu0 %v21
    %v1264 = vpop.f32.mrb[0].mxu0
    %v1265 = vadd.f32 %v556, %v1264
    %v1266 = vpop.f32.mrb[0].mxu0
    %v1267 = vadd.f32 %v560, %v1266
    %1268 = vmatprep.mubr.f32.mxu0 %v28
    %1269 = vmatmul.mubr.f32.gmra.mrb[0].mxu0 %v27
    %v1270 = vpop.f32.mrb[0].mxu0
    %v1271 = vadd.f32 %v556, %v1270
    %v1272 = vpop.f32.mrb[0].mxu0
    %v1273 = vadd.f32 %v560, %v1272
    %1274 = vmatprep.mubr.f32.mxu0 %v34
    %1275 = vmatmul.mubr.f32.gmra.mrb[0].mxu0 %v33
    %v1276 = vpop.f32.mrb[0].mxu0
    %v1277 = vadd.f32 %v556, %v1276
    %v1278 = vpop.f32.mrb[0].mxu0
    %v1279 = vadd.f32 %v560, %v1278
    %1280 = vmatprep.mubr.f32.mxu0 %v40
    %1281 = vmatmul.mubr.f32.gmra.mrb[0].mxu0 %v39
    %v1282 = vpop.f32.mrb[0].mxu0
    %v1283 = vadd.f32 %v556, %v1282
    %v1284 = vpop.f32.mrb[0].mxu0
    %v1285 = vadd.f32 %v560, %v1284
    %1286 = vmatprep.mubr.f32.mxu0 %v46
    %1287 = vmatmul.mubr.f32.gmra.mrb[0].mxu0 %v45
    %v1288 = vpop.f32.mrb[0].mxu0
    %v1289 = vadd.f32 %v556, %v1288
    %v1290 = vpop.f32.mrb[0].mxu0
    %v1291 = vadd.f32 %v560, %v1290
    %1292 = vmatprep.mubr.f32.mxu0 %v52
    %1293 = vmatmul.mubr.f32.gmra.mrb[0].mxu0 %v51
    %v1294 = vpop.f32.mrb[0].mxu0
    %v1295 = vadd.f32 %v556, %v1294
    %v1296 = vpop.f32.mrb[0].mxu0
    %v1297 = vadd.f32 %v560, %v1296
    %1298 = vmatprep.mubr.f32.mxu0 %v58
    %1299 = vmatmul.mubr.f32.gmra.mrb[0].mxu0 %v57
    %v1300 = vpop.f32.mrb[0].mxu0
    %v1301 = vadd.f32 %v556, %v1300
    %v1302 = vpop.f32.mrb[0].mxu0
    %v1303 = vadd.f32 %v560, %v1302
    %1304 = vmatprep.mubr.f32.mxu0 %v64
    %1305 = vmatmul.mubr.f32.gmra.mrb[0].mxu0 %v63
    %v1306 = vpop.f32.mrb[0].mxu0
    %v1307 = vadd.f32 %v556, %v1306
    %v1308 = vpop.f32.mrb[0].mxu0
    %v1309 = vadd.f32 %v560, %v1308
    %1310 = vmatprep.mubr.f32.mxu0 %v70
    %1311 = vmatmul.mubr.f32.gmra.mrb[0].mxu0 %v69
    %v1312 = vpop.f32.mrb[0].mxu0
    %v1313 = vadd.f32 %v556, %v1312
    %v1314 = vpop.f32.mrb[0].mxu0
    %v1315 = vadd.f32 %v560, %v1314
    %1316 = vmatprep.mubr.f32.mxu0 %v76
    %1317 = vmatmul.mubr.f32.gmra.mrb[0].mxu0 %v75
    %v1318 = vpop.f32.mrb[0].mxu0
    %v1319 = vadd.f32 %v556, %v1318
    %v1320 = vpop.f32.mrb[0].mxu0
    %v1321 = vadd.f32 %v560, %v1320
    %1322 = vmatprep.mubr.f32.mxu0 %v82
    %1323 = vmatmul.mubr.f32.gmra.mrb[0].mxu0 %v81
    %v1324 = vpop.f32.mrb[0].mxu0
    %v1325 = vadd.f32 %v556, %v1324
    %v1326 = vpop.f32.mrb[0].mxu0
    %v1327 = vadd.f32 %v560, %v1326
    %1328 = vmatprep.mubr.f32.mxu0 %v88
    %1329 = vmatmul.mubr.f32.gmra.mrb[0].mxu0 %v87
    %v1330 = vpop.f32.mrb[0].mxu0
    %v1331 = vadd.f32 %v556, %v1330
    %v1332 = vpop.f32.mrb[0].mxu0
    %v1333 = vadd.f32 %v560, %v1332
    %1334 = vmatprep.mubr.f32.mxu0 %v94
    %1335 = vmatmul.mubr.f32.gmra.mrb[0].mxu0 %v93
    %v1336 = vpop.f32.mrb[0].mxu0
    %v1337 = vadd.f32 %v556, %v1336
    %v1338 = vpop.f32.mrb[0].mxu0
    %v1339 = vadd.f32 %v560, %v1338
    %1340 = vmatprep.mubr.f32.mxu0 %v100
    %1341 = vmatmul.mubr.f32.gmra.mrb[0].mxu0 %v99
    %v1342 = vpop.f32.mrb[0].mxu0
    %v1343 = vadd.f32 %v556, %v1342
    %v1344 = vpop.f32.mrb[0].mxu0
    %v1345 = vadd.f32 %v560, %v1344
    %1346 = vmatprep.mubr.f32.mxu0 %v106
    %1347 = vmatmul.mubr.f32.gmra.mrb[0].mxu0 %v105
    %v1348 = vpop.f32.mrb[0].mxu0
    %v1349 = vadd.f32 %v556, %v1348
    %v1350 = vpop.f32.mrb[0].mxu0
    %v1351 = vadd.f32 %v560, %v1350
    %1352 = vmatprep.mubr.f32.mxu0 %v112
    %1353 = vmatmul.mubr.f32.gmra.mrb[0].mxu0 %v111
    %v1354 = vpop.f32.mrb[0].mxu0
    %v1355 = vadd.f32 %v556, %v1354
    %v1356 = vpop.f32.mrb[0].mxu0
    %v1357 = vadd.f32 %v560, %v1356
    %1358 = vmatprep.mubr.f32.mxu0 %v118
    %1359 = vmatmul.mubr.f32.gmra.mrb[0].mxu0 %v117
    %v1360 = vpop.f32.mrb[0].mxu0
    %v1361 = vadd.f32 %v556, %v1360
    %v1362 = vpop.f32.mrb[0].mxu0
    %v1363 = vadd.f32 %v560, %v1362
    %1364 = vmatprep.mubr.f32.mxu0 %v124
    %1365 = vmatmul.mubr.f32.gmra.mrb[0].mxu0 %v123
    %v1366 = vpop.f32.mrb[0].mxu0
    %v1367 = vadd.f32 %v556, %v1366
    %v1368 = vpop.f32.mrb[0].mxu0
    %v1369 = vadd.f32 %v560, %v1368
    %1370 = vmatprep.mubr.f32.mxu0 %v130
    %1371 = vmatmul.mubr.f32.gmra.mrb[0].mxu0 %v129
    %v1372 = vpop.f32.mrb[0].mxu0
    %v1373 = vadd.f32 %v556, %v1372
    %v1374 = vpop.f32.mrb[0].mxu0
    %v1375 = vadd.f32 %v560, %v1374
    %1376 = vmatprep.mubr.f32.mxu0 %v136
    %1377 = vmatmul.mubr.f32.gmra.mrb[0].mxu0 %v135
    %v1378 = vpop.f32.mrb[0].mxu0
    %v1379 = vadd.f32 %v556, %v1378
    %v1380 = vpop.f32.mrb[0].mxu0
    %v1381 = vadd.f32 %v560, %v1380
    %1382 = vmatprep.mubr.f32.mxu0 %v142
    %1383 = vmatmul.mubr.f32.gmra.mrb[0].mxu0 %v141
    %v1384 = vpop.f32.mrb[0].mxu0
    %v1385 = vadd.f32 %v556, %v1384
    %v1386 = vpop.f32.mrb[0].mxu0
    %v1387 = vadd.f32 %v560, %v1386
    %1388 = vmatprep.mubr.f32.mxu0 %v148
    %1389 = vmatmul.mubr.f32.gmra.mrb[0].mxu0 %v147
    %v1390 = vpop.f32.mrb[0].mxu0
    %v1391 = vadd.f32 %v556, %v1390
    %v1392 = vpop.f32.mrb[0].mxu0
    %v1393 = vadd.f32 %v560, %v1392
    %1394 = vmatprep.mubr.f32.mxu0 %v154
    %1395 = vmatmul.mubr.f32.gmra.mrb[0].mxu0 %v153
    %v1396 = vpop.f32.mrb[0].mxu0
    %v1397 = vadd.f32 %v556, %v1396
    %v1398 = vpop.f32.mrb[0].mxu0
    %v1399 = vadd.f32 %v560, %v1398
    %1400 = vdwg.mxu0
    %1401 = vmatprep.subr.mxu0 %v354
    %1402 = vmatpush1.xpose.msra.mxu0 %v353
    %1403 = vmatprep.subr.mxu0 %v360
    %1404 = vmatpush1.xpose.msra.mxu0 %v359
    %1405 = vmatprep.subr.mxu0 %v366
    %1406 = vmatpush1.xpose.msra.mxu0 %v365
    %1407 = vmatprep.subr.mxu0 %v372
    %1408 = vmatpush1.xpose.msra.mxu0 %v371
    %1409 = vmatprep.subr.mxu0 %v378
    %1410 = vmatpush1.xpose.msra.mxu0 %v377
    %1411 = vmatprep.subr.mxu0 %v384
    %1412 = vmatpush1.xpose.msra.mxu0 %v383
    %1413 = vmatprep.subr.mxu0 %v390
    %1414 = vmatpush1.xpose.msra.mxu0 %v389
    %1415 = vmatprep.subr.mxu0 %v396
    %1416 = vmatpush1.xpose.msra.mxu0 %v395
    %1417 = vmatprep.subr.mxu0 %v402
    %1418 = vmatpush1.xpose.msra.mxu0 %v401
    %1419 = vmatprep.subr.mxu0 %v408
    %1420 = vmatpush1.xpose.msra.mxu0 %v407
    %1421 = vmatprep.subr.mxu0 %v414
    %1422 = vmatpush1.xpose.msra.mxu0 %v413
    %1423 = vmatprep.subr.mxu0 %v420
    %1424 = vmatpush1.xpose.msra.mxu0 %v419
    %1425 = vmatprep.subr.mxu0 %v426
    %1426 = vmatpush1.xpose.msra.mxu0 %v425
    %1427 = vmatprep.subr.mxu0 %v432
    %1428 = vmatpush1.xpose.msra.mxu0 %v431
    %1429 = vmatprep.subr.mxu0 %v438
    %1430 = vmatpush1.xpose.msra.mxu0 %v437
    %1431 = vmatprep.subr.mxu0 %v444
    %1432 = vmatpush1.xpose.msra.mxu0 %v443
    %1433 = vmatprep.subr.mxu0 %v450
    %1434 = vmatpush1.xpose.msra.mxu0 %v449
    %1435 = vmatprep.subr.mxu0 %v456
    %1436 = vmatpush1.xpose.msra.mxu0 %v455
    %1437 = vmatprep.subr.mxu0 %v462
    %1438 = vmatpush1.xpose.msra.mxu0 %v461
    %1439 = vmatprep.subr.mxu0 %v468
    %1440 = vmatpush1.xpose.msra.mxu0 %v467
    %1441 = vmatprep.subr.mxu0 %v474
    %1442 = vmatpush1.xpose.msra.mxu0 %v473
    %1443 = vmatprep.subr.mxu0 %v480
    %1444 = vmatpush1.xpose.msra.mxu0 %v479
    %1445 = vmatprep.subr.mxu0 %v486
    %1446 = vmatpush1.xpose.msra.mxu0 %v485
    %1447 = vmatprep.subr.mxu0 %v492
    %1448 = vmatpush1.xpose.msra.mxu0 %v491
    %1449 = vmatprep.subr.mxu0 %v498
    %1450 = vmatpush1.xpose.msra.mxu0 %v497
    %1451 = vmatprep.subr.mxu0 %v504
    %1452 = vmatpush1.xpose.msra.mxu0 %v503
    %1453 = vmatprep.subr.mxu0 %v510
    %1454 = vmatpush1.xpose.msra.mxu0 %v509
    %1455 = vmatprep.subr.mxu0 %v516
    %1456 = vmatpush1.xpose.msra.mxu0 %v515
    %1457 = vmatprep.subr.mxu0 %v522
    %1458 = vmatpush1.xpose.msra.mxu0 %v521
    %1459 = vmatprep.subr.mxu0 %v528
    %1460 = vmatpush1.xpose.msra.mxu0 %v527
    %1461 = vmatprep.subr.mxu0 %v534
    %1462 = vmatpush1.xpose.msra.mxu0 %v533
    %1463 = vmatprep.subr.mxu0 %v540
    %1464 = vmatpush1.xpose.msra.mxu0 %v539
    %1465 = vmatprep.mubr.f32.mxu0 %v18
    %1466 = vmatmul.mubr.f32.gmra.mrb[0].mxu0 %v17
    %v1467 = vpop.f32.mrb[0].mxu0
    %v1468 = vadd.f32 %v1259, %v1467
    %v1469 = vpop.f32.mrb[0].mxu0
    %v1470 = vadd.f32 %v1261, %v1469
    %1471 = vmatprep.mubr.f32.mxu0 %v24
    %1472 = vmatmul.mubr.f32.gmra.mrb[0].mxu0 %v23
    %v1473 = vpop.f32.mrb[0].mxu0
    %v1474 = vadd.f32 %v1265, %v1473
    %v1475 = vpop.f32.mrb[0].mxu0
    %v1476 = vadd.f32 %v1267, %v1475
    %1477 = vmatprep.mubr.f32.mxu0 %v30
    %1478 = vmatmul.mubr.f32.gmra.mrb[0].mxu0 %v29
    %v1479 = vpop.f32.mrb[0].mxu0
    %v1480 = vadd.f32 %v1271, %v1479
    %v1481 = vpop.f32.mrb[0].mxu0
    %v1482 = vadd.f32 %v1273, %v1481
    %1483 = vmatprep.mubr.f32.mxu0 %v36
    %1484 = vmatmul.mubr.f32.gmra.mrb[0].mxu0 %v35
    %v1485 = vpop.f32.mrb[0].mxu0
    %v1486 = vadd.f32 %v1277, %v1485
    %v1487 = vpop.f32.mrb[0].mxu0
    %v1488 = vadd.f32 %v1279, %v1487
    %1489 = vmatprep.mubr.f32.mxu0 %v42
    %1490 = vmatmul.mubr.f32.gmra.mrb[0].mxu0 %v41
    %v1491 = vpop.f32.mrb[0].mxu0
    %v1492 = vadd.f32 %v1283, %v1491
    %v1493 = vpop.f32.mrb[0].mxu0
    %v1494 = vadd.f32 %v1285, %v1493
    %1495 = vmatprep.mubr.f32.mxu0 %v48
    %1496 = vmatmul.mubr.f32.gmra.mrb[0].mxu0 %v47
    %v1497 = vpop.f32.mrb[0].mxu0
    %v1498 = vadd.f32 %v1289, %v1497
    %v1499 = vpop.f32.mrb[0].mxu0
    %v1500 = vadd.f32 %v1291, %v1499
    %1501 = vmatprep.mubr.f32.mxu0 %v54
    %1502 = vmatmul.mubr.f32.gmra.mrb[0].mxu0 %v53
    %v1503 = vpop.f32.mrb[0].mxu0
    %v1504 = vadd.f32 %v1295, %v1503
    %v1505 = vpop.f32.mrb[0].mxu0
    %v1506 = vadd.f32 %v1297, %v1505
    %1507 = vmatprep.mubr.f32.mxu0 %v60
    %1508 = vmatmul.mubr.f32.gmra.mrb[0].mxu0 %v59
    %v1509 = vpop.f32.mrb[0].mxu0
    %v1510 = vadd.f32 %v1301, %v1509
    %v1511 = vpop.f32.mrb[0].mxu0
    %v1512 = vadd.f32 %v1303, %v1511
    %1513 = vmatprep.mubr.f32.mxu0 %v66
    %1514 = vmatmul.mubr.f32.gmra.mrb[0].mxu0 %v65
    %v1515 = vpop.f32.mrb[0].mxu0
    %v1516 = vadd.f32 %v1307, %v1515
    %v1517 = vpop.f32.mrb[0].mxu0
    %v1518 = vadd.f32 %v1309, %v1517
    %1519 = vmatprep.mubr.f32.mxu0 %v72
    %1520 = vmatmul.mubr.f32.gmra.mrb[0].mxu0 %v71
    %v1521 = vpop.f32.mrb[0].mxu0
    %v1522 = vadd.f32 %v1313, %v1521
    %v1523 = vpop.f32.mrb[0].mxu0
    %v1524 = vadd.f32 %v1315, %v1523
    %1525 = vmatprep.mubr.f32.mxu0 %v78
    %1526 = vmatmul.mubr.f32.gmra.mrb[0].mxu0 %v77
    %v1527 = vpop.f32.mrb[0].mxu0
    %v1528 = vadd.f32 %v1319, %v1527
    %v1529 = vpop.f32.mrb[0].mxu0
    %v1530 = vadd.f32 %v1321, %v1529
    %1531 = vmatprep.mubr.f32.mxu0 %v84
    %1532 = vmatmul.mubr.f32.gmra.mrb[0].mxu0 %v83
    %v1533 = vpop.f32.mrb[0].mxu0
    %v1534 = vadd.f32 %v1325, %v1533
    %v1535 = vpop.f32.mrb[0].mxu0
    %v1536 = vadd.f32 %v1327, %v1535
    %1537 = vmatprep.mubr.f32.mxu0 %v90
    %1538 = vmatmul.mubr.f32.gmra.mrb[0].mxu0 %v89
    %v1539 = vpop.f32.mrb[0].mxu0
    %v1540 = vadd.f32 %v1331, %v1539
    %v1541 = vpop.f32.mrb[0].mxu0
    %v1542 = vadd.f32 %v1333, %v1541
    %1543 = vmatprep.mubr.f32.mxu0 %v96
    %1544 = vmatmul.mubr.f32.gmra.mrb[0].mxu0 %v95
    %v1545 = vpop.f32.mrb[0].mxu0
    %v1546 = vadd.f32 %v1337, %v1545
    %v1547 = vpop.f32.mrb[0].mxu0
    %v1548 = vadd.f32 %v1339, %v1547
    %1549 = vmatprep.mubr.f32.mxu0 %v102
    %1550 = vmatmul.mubr.f32.gmra.mrb[0].mxu0 %v101
    %v1551 = vpop.f32.mrb[0].mxu0
    %v1552 = vadd.f32 %v1343, %v1551
    %v1553 = vpop.f32.mrb[0].mxu0
    %v1554 = vadd.f32 %v1345, %v1553
    %1555 = vmatprep.mubr.f32.mxu0 %v108
    %1556 = vmatmul.mubr.f32.gmra.mrb[0].mxu0 %v107
    %v1557 = vpop.f32.mrb[0].mxu0
    %v1558 = vadd.f32 %v1349, %v1557
    %v1559 = vpop.f32.mrb[0].mxu0
    %v1560 = vadd.f32 %v1351, %v1559
    %1561 = vmatprep.mubr.f32.mxu0 %v114
    %1562 = vmatmul.mubr.f32.gmra.mrb[0].mxu0 %v113
    %v1563 = vpop.f32.mrb[0].mxu0
    %v1564 = vadd.f32 %v1355, %v1563
    %v1565 = vpop.f32.mrb[0].mxu0
    %v1566 = vadd.f32 %v1357, %v1565
    %1567 = vmatprep.mubr.f32.mxu0 %v120
    %1568 = vmatmul.mubr.f32.gmra.mrb[0].mxu0 %v119
    %v1569 = vpop.f32.mrb[0].mxu0
    %v1570 = vadd.f32 %v1361, %v1569
    %v1571 = vpop.f32.mrb[0].mxu0
    %v1572 = vadd.f32 %v1363, %v1571
    %1573 = vmatprep.mubr.f32.mxu0 %v126
    %1574 = vmatmul.mubr.f32.gmra.mrb[0].mxu0 %v125
    %v1575 = vpop.f32.mrb[0].mxu0
    %v1576 = vadd.f32 %v1367, %v1575
    %v1577 = vpop.f32.mrb[0].mxu0
    %v1578 = vadd.f32 %v1369, %v1577
    %1579 = vmatprep.mubr.f32.mxu0 %v132
    %1580 = vmatmul.mubr.f32.gmra.mrb[0].mxu0 %v131
    %v1581 = vpop.f32.mrb[0].mxu0
    %v1582 = vadd.f32 %v1373, %v1581
    %v1583 = vpop.f32.mrb[0].mxu0
    %v1584 = vadd.f32 %v1375, %v1583
    %1585 = vmatprep.mubr.f32.mxu0 %v138
    %1586 = vmatmul.mubr.f32.gmra.mrb[0].mxu0 %v137
    %v1587 = vpop.f32.mrb[0].mxu0
    %v1588 = vadd.f32 %v1379, %v1587
    %v1589 = vpop.f32.mrb[0].mxu0
    %v1590 = vadd.f32 %v1381, %v1589
    %1591 = vmatprep.mubr.f32.mxu0 %v144
    %1592 = vmatmul.mubr.f32.gmra.mrb[0].mxu0 %v143
    %v1593 = vpop.f32.mrb[0].mxu0
    %v1594 = vadd.f32 %v1385, %v1593
    %v1595 = vpop.f32.mrb[0].mxu0
    %v1596 = vadd.f32 %v1387, %v1595
    %1597 = vmatprep.mubr.f32.mxu0 %v150
    %1598 = vmatmul.mubr.f32.gmra.mrb[0].mxu0 %v149
    %v1599 = vpop.f32.mrb[0].mxu0
    %v1600 = vadd.f32 %v1391, %v1599
    %v1601 = vpop.f32.mrb[0].mxu0
    %v1602 = vadd.f32 %v1393, %v1601
    %1603 = vmatprep.mubr.f32.mxu0 %v156
    %1604 = vmatmul.mubr.f32.gmra.mrb[0].mxu0 %v155
    %v1605 = vpop.f32.mrb[0].mxu0
    %v1606 = vadd.f32 %v1397, %v1605
    %v1607 = vpop.f32.mrb[0].mxu0
    %v1608 = vadd.f32 %v1399, %v1607
    %1609 = vdwg.mxu0
    %1610 = vmatprep.subr.mxu0 %v356
    %1611 = vmatpush1.xpose.msra.mxu0 %v355
    %1612 = vmatprep.subr.mxu0 %v362
    %1613 = vmatpush1.xpose.msra.mxu0 %v361
    %1614 = vmatprep.subr.mxu0 %v368
    %1615 = vmatpush1.xpose.msra.mxu0 %v367
    %1616 = vmatprep.subr.mxu0 %v374
    %1617 = vmatpush1.xpose.msra.mxu0 %v373
    %1618 = vmatprep.subr.mxu0 %v380
    %1619 = vmatpush1.xpose.msra.mxu0 %v379
    %1620 = vmatprep.subr.mxu0 %v386
    %1621 = vmatpush1.xpose.msra.mxu0 %v385
    %1622 = vmatprep.subr.mxu0 %v392
    %1623 = vmatpush1.xpose.msra.mxu0 %v391
    %1624 = vmatprep.subr.mxu0 %v398
    %1625 = vmatpush1.xpose.msra.mxu0 %v397
    %1626 = vmatprep.subr.mxu0 %v404
    %1627 = vmatpush1.xpose.msra.mxu0 %v403
    %1628 = vmatprep.subr.mxu0 %v410
    %1629 = vmatpush1.xpose.msra.mxu0 %v409
    %1630 = vmatprep.subr.mxu0 %v416
    %1631 = vmatpush1.xpose.msra.mxu0 %v415
    %1632 = vmatprep.subr.mxu0 %v422
    %1633 = vmatpush1.xpose.msra.mxu0 %v421
    %1634 = vmatprep.subr.mxu0 %v428
    %1635 = vmatpush1.xpose.msra.mxu0 %v427
    %1636 = vmatprep.subr.mxu0 %v434
    %1637 = vmatpush1.xpose.msra.mxu0 %v433
    %1638 = vmatprep.subr.mxu0 %v440
    %1639 = vmatpush1.xpose.msra.mxu0 %v439
    %1640 = vmatprep.subr.mxu0 %v446
    %1641 = vmatpush1.xpose.msra.mxu0 %v445
    %1642 = vmatprep.subr.mxu0 %v452
    %1643 = vmatpush1.xpose.msra.mxu0 %v451
    %1644 = vmatprep.subr.mxu0 %v458
    %1645 = vmatpush1.xpose.msra.mxu0 %v457
    %1646 = vmatprep.subr.mxu0 %v464
    %1647 = vmatpush1.xpose.msra.mxu0 %v463
    %1648 = vmatprep.subr.mxu0 %v470
    %1649 = vmatpush1.xpose.msra.mxu0 %v469
    %1650 = vmatprep.subr.mxu0 %v476
    %1651 = vmatpush1.xpose.msra.mxu0 %v475
    %1652 = vmatprep.subr.mxu0 %v482
    %1653 = vmatpush1.xpose.msra.mxu0 %v481
    %1654 = vmatprep.subr.mxu0 %v488
    %1655 = vmatpush1.xpose.msra.mxu0 %v487
    %1656 = vmatprep.subr.mxu0 %v494
    %1657 = vmatpush1.xpose.msra.mxu0 %v493
    %1658 = vmatprep.subr.mxu0 %v500
    %1659 = vmatpush1.xpose.msra.mxu0 %v499
    %1660 = vmatprep.subr.mxu0 %v506
    %1661 = vmatpush1.xpose.msra.mxu0 %v505
    %1662 = vmatprep.subr.mxu0 %v512
    %1663 = vmatpush1.xpose.msra.mxu0 %v511
    %1664 = vmatprep.subr.mxu0 %v518
    %1665 = vmatpush1.xpose.msra.mxu0 %v517
    %1666 = vmatprep.subr.mxu0 %v524
    %1667 = vmatpush1.xpose.msra.mxu0 %v523
    %1668 = vmatprep.subr.mxu0 %v530
    %1669 = vmatpush1.xpose.msra.mxu0 %v529
    %1670 = vmatprep.subr.mxu0 %v536
    %1671 = vmatpush1.xpose.msra.mxu0 %v535
    %1672 = vmatprep.subr.mxu0 %v542
    %1673 = vmatpush1.xpose.msra.mxu0 %v541
    %1674 = vmatprep.mubr.f32.mxu0 %v20
    %1675 = vmatmul.mubr.f32.gmra.mrb[0].mxu0 %v19
    %v1676 = vpop.f32.mrb[0].mxu0
    %v1677 = vadd.f32 %v1468, %v1676
    %v1678 = vpop.f32.mrb[0].mxu0
    %v1679 = vadd.f32 %v1470, %v1678
    %1680 = vmatprep.mubr.f32.mxu0 %v26
    %1681 = vmatmul.mubr.f32.gmra.mrb[0].mxu0 %v25
    %v1682 = vpop.f32.mrb[0].mxu0
    %v1683 = vadd.f32 %v1474, %v1682
    %v1684 = vpop.f32.mrb[0].mxu0
    %v1685 = vadd.f32 %v1476, %v1684
    %1686 = vmatprep.mubr.f32.mxu0 %v32
    %1687 = vmatmul.mubr.f32.gmra.mrb[0].mxu0 %v31
    %v1688 = vpop.f32.mrb[0].mxu0
    %v1689 = vadd.f32 %v1480, %v1688
    %v1690 = vpop.f32.mrb[0].mxu0
    %v1691 = vadd.f32 %v1482, %v1690
    %1692 = vmatprep.mubr.f32.mxu0 %v38
    %1693 = vmatmul.mubr.f32.gmra.mrb[0].mxu0 %v37
    %v1694 = vpop.f32.mrb[0].mxu0
    %v1695 = vadd.f32 %v1486, %v1694
    %v1696 = vpop.f32.mrb[0].mxu0
    %v1697 = vadd.f32 %v1488, %v1696
    %1698 = vmatprep.mubr.f32.mxu0 %v44
    %1699 = vmatmul.mubr.f32.gmra.mrb[0].mxu0 %v43
    %v1700 = vpop.f32.mrb[0].mxu0
    %v1701 = vadd.f32 %v1492, %v1700
    %v1702 = vpop.f32.mrb[0].mxu0
    %v1703 = vadd.f32 %v1494, %v1702
    %1704 = vmatprep.mubr.f32.mxu0 %v50
    %1705 = vmatmul.mubr.f32.gmra.mrb[0].mxu0 %v49
    %v1706 = vpop.f32.mrb[0].mxu0
    %v1707 = vadd.f32 %v1498, %v1706
    %v1708 = vpop.f32.mrb[0].mxu0
    %v1709 = vadd.f32 %v1500, %v1708
    %1710 = vmatprep.mubr.f32.mxu0 %v56
    %1711 = vmatmul.mubr.f32.gmra.mrb[0].mxu0 %v55
    %v1712 = vpop.f32.mrb[0].mxu0
    %v1713 = vadd.f32 %v1504, %v1712
    %v1714 = vpop.f32.mrb[0].mxu0
    %v1715 = vadd.f32 %v1506, %v1714
    %1716 = vmatprep.mubr.f32.mxu0 %v62
    %1717 = vmatmul.mubr.f32.gmra.mrb[0].mxu0 %v61
    %v1718 = vpop.f32.mrb[0].mxu0
    %v1719 = vadd.f32 %v1510, %v1718
    %v1720 = vpop.f32.mrb[0].mxu0
    %v1721 = vadd.f32 %v1512, %v1720
    %1722 = vmatprep.mubr.f32.mxu0 %v68
    %1723 = vmatmul.mubr.f32.gmra.mrb[0].mxu0 %v67
    %v1724 = vpop.f32.mrb[0].mxu0
    %v1725 = vadd.f32 %v1516, %v1724
    %v1726 = vpop.f32.mrb[0].mxu0
    %v1727 = vadd.f32 %v1518, %v1726
    %1728 = vmatprep.mubr.f32.mxu0 %v74
    %1729 = vmatmul.mubr.f32.gmra.mrb[0].mxu0 %v73
    %v1730 = vpop.f32.mrb[0].mxu0
    %v1731 = vadd.f32 %v1522, %v1730
    %v1732 = vpop.f32.mrb[0].mxu0
    %v1733 = vadd.f32 %v1524, %v1732
    %1734 = vmatprep.mubr.f32.mxu0 %v80
    %1735 = vmatmul.mubr.f32.gmra.mrb[0].mxu0 %v79
    %v1736 = vpop.f32.mrb[0].mxu0
    %v1737 = vadd.f32 %v1528, %v1736
    %v1738 = vpop.f32.mrb[0].mxu0
    %v1739 = vadd.f32 %v1530, %v1738
    %1740 = vmatprep.mubr.f32.mxu0 %v86
    %1741 = vmatmul.mubr.f32.gmra.mrb[0].mxu0 %v85
    %v1742 = vpop.f32.mrb[0].mxu0
    %v1743 = vadd.f32 %v1534, %v1742
    %v1744 = vpop.f32.mrb[0].mxu0
    %v1745 = vadd.f32 %v1536, %v1744
    %1746 = vmatprep.mubr.f32.mxu0 %v92
    %1747 = vmatmul.mubr.f32.gmra.mrb[0].mxu0 %v91
    %v1748 = vpop.f32.mrb[0].mxu0
    %v1749 = vadd.f32 %v1540, %v1748
    %v1750 = vpop.f32.mrb[0].mxu0
    %v1751 = vadd.f32 %v1542, %v1750
    %1752 = vmatprep.mubr.f32.mxu0 %v98
    %1753 = vmatmul.mubr.f32.gmra.mrb[0].mxu0 %v97
    %v1754 = vpop.f32.mrb[0].mxu0
    %v1755 = vadd.f32 %v1546, %v1754
    %v1756 = vpop.f32.mrb[0].mxu0
    %v1757 = vadd.f32 %v1548, %v1756
    %1758 = vmatprep.mubr.f32.mxu0 %v104
    %1759 = vmatmul.mubr.f32.gmra.mrb[0].mxu0 %v103
    %v1760 = vpop.f32.mrb[0].mxu0
    %v1761 = vadd.f32 %v1552, %v1760
    %v1762 = vpop.f32.mrb[0].mxu0
    %v1763 = vadd.f32 %v1554, %v1762
    %1764 = vmatprep.mubr.f32.mxu0 %v110
    %1765 = vmatmul.mubr.f32.gmra.mrb[0].mxu0 %v109
    %v1766 = vpop.f32.mrb[0].mxu0
    %v1767 = vadd.f32 %v1558, %v1766
    %v1768 = vpop.f32.mrb[0].mxu0
    %v1769 = vadd.f32 %v1560, %v1768
    %1770 = vmatprep.mubr.f32.mxu0 %v116
    %1771 = vmatmul.mubr.f32.gmra.mrb[0].mxu0 %v115
    %v1772 = vpop.f32.mrb[0].mxu0
    %v1773 = vadd.f32 %v1564, %v1772
    %v1774 = vpop.f32.mrb[0].mxu0
    %v1775 = vadd.f32 %v1566, %v1774
    %1776 = vmatprep.mubr.f32.mxu0 %v122
    %1777 = vmatmul.mubr.f32.gmra.mrb[0].mxu0 %v121
    %v1778 = vpop.f32.mrb[0].mxu0
    %v1779 = vadd.f32 %v1570, %v1778
    %v1780 = vpop.f32.mrb[0].mxu0
    %v1781 = vadd.f32 %v1572, %v1780
    %1782 = vmatprep.mubr.f32.mxu0 %v128
    %1783 = vmatmul.mubr.f32.gmra.mrb[0].mxu0 %v127
    %v1784 = vpop.f32.mrb[0].mxu0
    %v1785 = vadd.f32 %v1576, %v1784
    %v1786 = vpop.f32.mrb[0].mxu0
    %v1787 = vadd.f32 %v1578, %v1786
    %1788 = vmatprep.mubr.f32.mxu0 %v134
    %1789 = vmatmul.mubr.f32.gmra.mrb[0].mxu0 %v133
    %v1790 = vpop.f32.mrb[0].mxu0
    %v1791 = vadd.f32 %v1582, %v1790
    %v1792 = vpop.f32.mrb[0].mxu0
    %v1793 = vadd.f32 %v1584, %v1792
    %1794 = vmatprep.mubr.f32.mxu0 %v140
    %1795 = vmatmul.mubr.f32.gmra.mrb[0].mxu0 %v139
    %v1796 = vpop.f32.mrb[0].mxu0
    %v1797 = vadd.f32 %v1588, %v1796
    %v1798 = vpop.f32.mrb[0].mxu0
    %v1799 = vadd.f32 %v1590, %v1798
    %1800 = vmatprep.mubr.f32.mxu0 %v146
    %1801 = vmatmul.mubr.f32.gmra.mrb[0].mxu0 %v145
    %v1802 = vpop.f32.mrb[0].mxu0
    %v1803 = vadd.f32 %v1594, %v1802
    %v1804 = vpop.f32.mrb[0].mxu0
    %v1805 = vadd.f32 %v1596, %v1804
    %1806 = vmatprep.mubr.f32.mxu0 %v152
    %1807 = vmatmul.mubr.f32.gmra.mrb[0].mxu0 %v151
    %v1808 = vpop.f32.mrb[0].mxu0
    %v1809 = vadd.f32 %v1600, %v1808
    %v1810 = vpop.f32.mrb[0].mxu0
    %v1811 = vadd.f32 %v1602, %v1810
    %1812 = vmatprep.mubr.f32.mxu0 %v158
    %1813 = vmatmul.mubr.f32.gmra.mrb[0].mxu0 %v157
    %v1814 = vpop.f32.mrb[0].mxu0
    %v1815 = vadd.f32 %v1606, %v1814
    %v1816 = vpop.f32.mrb[0].mxu0
    %v1817 = vadd.f32 %v1608, %v1816
    %1818 = vdwg.mxu0
    %1819 = vst [vmem:[#allocation2] sm:$0xff] %v1050
    %1820 = vst [vmem:[#allocation2 + $0x8] sm:$0xff] %v1052
    %1821 = vst [vmem:[#allocation2 + $0x10] sm:$0xff] %v1677
    %1822 = vst [vmem:[#allocation2 + $0x18] sm:$0xff] %v1679
    %1823 = vst [vmem:[#allocation2 + $0x20] sm:$0xff] %v1056
    %1824 = vst [vmem:[#allocation2 + $0x28] sm:$0xff] %v1058
    %1825 = vst [vmem:[#allocation2 + $0x30] sm:$0xff] %v1683
    %1826 = vst [vmem:[#allocation2 + $0x38] sm:$0xff] %v1685
    %1827 = vst [vmem:[#allocation2 + $0x40] sm:$0xff] %v1062
    %1828 = vst [vmem:[#allocation2 + $0x48] sm:$0xff] %v1064
    %1829 = vst [vmem:[#allocation2 + $0x50] sm:$0xff] %v1689
    %1830 = vst [vmem:[#allocation2 + $0x58] sm:$0xff] %v1691
    %1831 = vst [vmem:[#allocation2 + $0x60] sm:$0xff] %v1068
    %1832 = vst [vmem:[#allocation2 + $0x68] sm:$0xff] %v1070
    %1833 = vst [vmem:[#allocation2 + $0x70] sm:$0xff] %v1695
    %1834 = vst [vmem:[#allocation2 + $0x78] sm:$0xff] %v1697
    %1835 = vst [vmem:[#allocation2 + $0x80] sm:$0xff] %v1074
    %1836 = vst [vmem:[#allocation2 + $0x88] sm:$0xff] %v1076
    %1837 = vst [vmem:[#allocation2 + $0x90] sm:$0xff] %v1701
    %1838 = vst [vmem:[#allocation2 + $0x98] sm:$0xff] %v1703
    %1839 = vst [vmem:[#allocation2 + $0xa0] sm:$0xff] %v1080
    %1840 = vst [vmem:[#allocation2 + $0xa8] sm:$0xff] %v1082
    %1841 = vst [vmem:[#allocation2 + $0xb0] sm:$0xff] %v1707
    %1842 = vst [vmem:[#allocation2 + $0xb8] sm:$0xff] %v1709
    %1843 = vst [vmem:[#allocation2 + $0xc0] sm:$0xff] %v1086
    %1844 = vst [vmem:[#allocation2 + $0xc8] sm:$0xff] %v1088
    %1845 = vst [vmem:[#allocation2 + $0xd0] sm:$0xff] %v1713
    %1846 = vst [vmem:[#allocation2 + $0xd8] sm:$0xff] %v1715
    %1847 = vst [vmem:[#allocation2 + $0xe0] sm:$0xff] %v1092
    %1848 = vst [vmem:[#allocation2 + $0xe8] sm:$0xff] %v1094
    %1849 = vst [vmem:[#allocation2 + $0xf0] sm:$0xff] %v1719
    %1850 = vst [vmem:[#allocation2 + $0xf8] sm:$0xff] %v1721
    %1851 = vst [vmem:[#allocation2 + $0x100] sm:$0xff] %v1098
    %1852 = vst [vmem:[#allocation2 + $0x108] sm:$0xff] %v1100
    %1853 = vst [vmem:[#allocation2 + $0x110] sm:$0xff] %v1725
    %1854 = vst [vmem:[#allocation2 + $0x118] sm:$0xff] %v1727
    %1855 = vst [vmem:[#allocation2 + $0x120] sm:$0xff] %v1104
    %1856 = vst [vmem:[#allocation2 + $0x128] sm:$0xff] %v1106
    %1857 = vst [vmem:[#allocation2 + $0x130] sm:$0xff] %v1731
    %1858 = vst [vmem:[#allocation2 + $0x138] sm:$0xff] %v1733
    %1859 = vst [vmem:[#allocation2 + $0x140] sm:$0xff] %v1110
    %1860 = vst [vmem:[#allocation2 + $0x148] sm:$0xff] %v1112
    %1861 = vst [vmem:[#allocation2 + $0x150] sm:$0xff] %v1737
    %1862 = vst [vmem:[#allocation2 + $0x158] sm:$0xff] %v1739
    %1863 = vst [vmem:[#allocation2 + $0x160] sm:$0xff] %v1116
    %1864 = vst [vmem:[#allocation2 + $0x168] sm:$0xff] %v1118
    %1865 = vst [vmem:[#allocation2 + $0x170] sm:$0xff] %v1743
    %1866 = vst [vmem:[#allocation2 + $0x178] sm:$0xff] %v1745
    %1867 = vst [vmem:[#allocation2 + $0x180] sm:$0xff] %v1122
    %1868 = vst [vmem:[#allocation2 + $0x188] sm:$0xff] %v1124
    %1869 = vst [vmem:[#allocation2 + $0x190] sm:$0xff] %v1749
    %1870 = vst [vmem:[#allocation2 + $0x198] sm:$0xff] %v1751
    %1871 = vst [vmem:[#allocation2 + $0x1a0] sm:$0xff] %v1128
    %1872 = vst [vmem:[#allocation2 + $0x1a8] sm:$0xff] %v1130
    %1873 = vst [vmem:[#allocation2 + $0x1b0] sm:$0xff] %v1755
    %1874 = vst [vmem:[#allocation2 + $0x1b8] sm:$0xff] %v1757
    %1875 = vst [vmem:[#allocation2 + $0x1c0] sm:$0xff] %v1134
    %1876 = vst [vmem:[#allocation2 + $0x1c8] sm:$0xff] %v1136
    %1877 = vst [vmem:[#allocation2 + $0x1d0] sm:$0xff] %v1761
    %1878 = vst [vmem:[#allocation2 + $0x1d8] sm:$0xff] %v1763
    %1879 = vst [vmem:[#allocation2 + $0x1e0] sm:$0xff] %v1140
    %1880 = vst [vmem:[#allocation2 + $0x1e8] sm:$0xff] %v1142
    %1881 = vst [vmem:[#allocation2 + $0x1f0] sm:$0xff] %v1767
    %1882 = vst [vmem:[#allocation2 + $0x1f8] sm:$0xff] %v1769
    %1883 = vst [vmem:[#allocation2 + $0x200] sm:$0xff] %v1146
    %1884 = vst [vmem:[#allocation2 + $0x208] sm:$0xff] %v1148
    %1885 = vst [vmem:[#allocation2 + $0x210] sm:$0xff] %v1773
    %1886 = vst [vmem:[#allocation2 + $0x218] sm:$0xff] %v1775
    %1887 = vst [vmem:[#allocation2 + $0x220] sm:$0xff] %v1152
    %1888 = vst [vmem:[#allocation2 + $0x228] sm:$0xff] %v1154
    %1889 = vst [vmem:[#allocation2 + $0x230] sm:$0xff] %v1779
    %1890 = vst [vmem:[#allocation2 + $0x238] sm:$0xff] %v1781
    %1891 = vst [vmem:[#allocation2 + $0x240] sm:$0xff] %v1158
    %1892 = vst [vmem:[#allocation2 + $0x248] sm:$0xff] %v1160
    %1893 = vst [vmem:[#allocation2 + $0x250] sm:$0xff] %v1785
    %1894 = vst [vmem:[#allocation2 + $0x258] sm:$0xff] %v1787
    %1895 = vst [vmem:[#allocation2 + $0x260] sm:$0xff] %v1164
    %1896 = vst [vmem:[#allocation2 + $0x268] sm:$0xff] %v1166
    %1897 = vst [vmem:[#allocation2 + $0x270] sm:$0xff] %v1791
    %1898 = vst [vmem:[#allocation2 + $0x278] sm:$0xff] %v1793
    %1899 = vst [vmem:[#allocation2 + $0x280] sm:$0xff] %v1170
    %1900 = vst [vmem:[#allocation2 + $0x288] sm:$0xff] %v1172
    %1901 = vst [vmem:[#allocation2 + $0x290] sm:$0xff] %v1797
    %1902 = vst [vmem:[#allocation2 + $0x298] sm:$0xff] %v1799
    %1903 = vst [vmem:[#allocation2 + $0x2a0] sm:$0xff] %v1176
    %1904 = vst [vmem:[#allocation2 + $0x2a8] sm:$0xff] %v1178
    %1905 = vst [vmem:[#allocation2 + $0x2b0] sm:$0xff] %v1803
    %1906 = vst [vmem:[#allocation2 + $0x2b8] sm:$0xff] %v1805
    %1907 = vst [vmem:[#allocation2 + $0x2c0] sm:$0xff] %v1182
    %1908 = vst [vmem:[#allocation2 + $0x2c8] sm:$0xff] %v1184
    %1909 = vst [vmem:[#allocation2 + $0x2d0] sm:$0xff] %v1809
    %1910 = vst [vmem:[#allocation2 + $0x2d8] sm:$0xff] %v1811
    %1911 = vst [vmem:[#allocation2 + $0x2e0] sm:$0xff] %v1188
    %1912 = vst [vmem:[#allocation2 + $0x2e8] sm:$0xff] %v1190
    %1913 = vst [vmem:[#allocation2 + $0x2f0] sm:$0xff] %v1815
    %1914 = vst [vmem:[#allocation2 + $0x2f8] sm:$0xff] %v1817
    // Predicated region
    $region14: #{patch_embed.1} parent=1 // pred_check
      _
    $region15: #{patch_embed.1} parent=1 // pred_check_branch
      %1916 = sbr.rel (0) target = $region17
    $region16: #{patch_embed.1} parent=1 // pred_region
      %s1918 = ssub.s32 12288, 12288
      %1919 = vsyncadd [#allocation3], %s1918
      %s1920 = sshll.u32 [#allocation2], 4
      %s1921 = int_to_ptr.vmem [resolvable:$true] %s1920
      %1926 = dma.vmem_to_hbm [thread:$0]  %s1921, 12288, %s3, [#allocation3], 512, 512, 32
    $region17: #{patch_embed.1} parent=1 // pred_fallthru
      _
    // Predicated region
    $region18: #{patch_embed.1} parent=1 // pred_check
      _
    $region19: #{patch_embed.1} parent=1 // pred_check_branch
      %1928 = sbr.rel (0) target = $region21
    $region20: #{patch_embed.1} parent=1 // pred_region
      %1929 = dma.done [#allocation3], 12288
    $region21: #{patch_embed.1} parent=1 // pred_fallthru
      _
    %1930 = vsyncpa [#allocation3], 1

</llo_original>
